<compile_context>
chip_gen: v7x
topology: tpu7x:2x2x1
jax: 0.10.0
libtpu: 0.0.40
codegen_flags: <defaults>
</compile_context>

<pallas_src>
import jax
import jax.numpy as jnp
from jax import lax
from jax.experimental import pallas as pl
from jax.experimental.pallas import tpu as pltpu

# Spherical-harmonics constants (degree 3 -> 9 coefficients), torch-ngp SHEncoder.
C0 = 0.28209479177387814
C1 = 0.4886025119029199
C2 = (1.0925484305920792, -1.0925484305920792, 0.31539156525252005,
      -1.0925484305920792, 0.5462742152960396)

HIDDEN = 64
SIGMOID_SATURATION = 0.001


def _round_up(x, m):
    return ((x + m - 1) // m) * m


# ----------------------------------- kernel ----------------------------------
def common_decoder_kernel(pc_ref, dirs_ref, w1_ref, b1_ref, w2t_ref, b2_ref,
                          out_ref):
    # Elementwise math stays f32 (v5e has no bf16 VPU/EUP).
    pc = pc_ref[...].astype(jnp.float32)                     # (TN, C)
    d = dirs_ref[...].astype(jnp.float32)                    # (TN, 3)
    x, y, z = d[:, 0:1], d[:, 1:2], d[:, 2:3]
    xx, yy, zz = x * x, y * y, z * z

    # SH coefficients 1..8 (coefficient 0 is constant -> folded into the bias).
    feat = jnp.concatenate(
        [pc,
         -C1 * y, C1 * z, -C1 * x,
         C2[0] * (x * y), C2[1] * (y * z),
         C2[2] * (2.0 * zz - xx - yy),
         C2[3] * (x * z), C2[4] * (xx - yy)],
        axis=-1).astype(w1_ref.dtype)                        # (TN, C+8)

    # Fused base_net + dir_net: columns 0:64 = base, 64:128 = base + dir_out.
    pre = jnp.dot(feat, w1_ref[...],
                  preferred_element_type=jnp.float32) + b1_ref[...]   # (TN,128)
    h = pre * jax.nn.sigmoid(pre)            # SiLU -> [base_act | color_in]

    # Fused density + color head, produced transposed so the packed result is
    # lane-dense:  headT = W2^T @ h^T  via contraction on the last dims.
    headT = lax.dot_general(
        w2t_ref[...], h.astype(w2t_ref.dtype),
        dimension_numbers=(((1,), (1,)), ((), ())),
        preferred_element_type=jnp.float32) + b2_ref[...]             # (8, TN)

    is_sigma = lax.broadcasted_iota(jnp.int32, headT.shape, 0) == 0
    sig = jnp.exp(headT)                                     # TruncExp forward
    rgb = (jax.nn.sigmoid(headT) * (1.0 + 2.0 * SIGMOID_SATURATION)
           - SIGMOID_SATURATION)
    out_ref[...] = jnp.where(is_sigma, sig, rgb)[:4, :]      # (4, TN) store


# ------------------------------- parameter fusion -----------------------------
def _pack_params(p, compute_dtype):
    wb = p["wb"].astype(jnp.float32)
    bb = p["bb"].astype(jnp.float32).reshape(HIDDEN)
    wd = p["wd"].astype(jnp.float32)
    bd = p["bd"].astype(jnp.float32).reshape(1)
    wdir = p["wdir"].astype(jnp.float32)
    bdir = p["bdir"].astype(jnp.float32).reshape(HIDDEN)
    wc = p["wc"].astype(jnp.float32)
    bc = p["bc"].astype(jnp.float32).reshape(3)

    # Stage 1: [pc | sh1..sh8] @ W1 -> [base | base + dir_out]
    top = jnp.concatenate([wb, wb], axis=1)                              # (C,128)
    bot = jnp.concatenate([jnp.zeros((8, HIDDEN), jnp.float32),
                           wdir[1:9]], axis=1)                           # (8,128)
    w1 = jnp.concatenate([top, bot], axis=0).astype(compute_dtype)       # (C+8,128)
    b1 = jnp.concatenate([bb, bb + bdir + C0 * wdir[0]],
                         axis=0).reshape(1, 2 * HIDDEN)                  # (1,128) f32

    # Stage 2 (transposed, padded to 8 sublanes): rows = [sigma, r, g, b, 0...]
    r0 = jnp.concatenate([wd[:, 0], jnp.zeros((HIDDEN,), jnp.float32)])[None]  # (1,128)
    r13 = jnp.concatenate([jnp.zeros((3, HIDDEN), jnp.float32), wc.T], axis=1)  # (3,128)
    w2t = jnp.concatenate(
        [r0, r13, jnp.zeros((4, 2 * HIDDEN), jnp.float32)],
        axis=0).astype(compute_dtype)                                    # (8,128)
    b2 = jnp.concatenate([bd, bc, jnp.zeros((4,), jnp.float32)]).reshape(8, 1)  # f32
    return w1, b1, w2t, b2


# ----------------------------------- wrapper ----------------------------------
def common_decoder_forward(point_code, dirs, params, *, tn=1024):
    """CommonDecoder forward. Returns (sigmas [N], rgbs [N, 3]) in float32."""
    if isinstance(dirs, (list, tuple)):
        dirs = jnp.concatenate(dirs, axis=0) if len(dirs) > 1 else dirs[0]

    N, C = point_code.shape
    compute_dtype = (jnp.bfloat16 if point_code.dtype == jnp.dtype(jnp.bfloat16)
                     else jnp.float32)
    w1, b1, w2t, b2 = _pack_params(params, compute_dtype)
    K = w1.shape[0]                                   # C + 8

    tn_eff = min(tn, _round_up(N, 128))               # keep lane-dim % 128 == 0
    grid = (pl.cdiv(N, tn_eff),)                      # no jnp.pad; ragged tail masked

    row_tiled = lambda shape: pl.BlockSpec(shape, lambda i: (i, 0))
    whole = lambda shape: pl.BlockSpec(shape, lambda i: (0, 0))

    packed = pl.pallas_call(
        common_decoder_kernel,
        out_shape=jax.ShapeDtypeStruct((4, N), jnp.float32),
        grid_spec=pltpu.PrefetchScalarGridSpec(
            num_scalar_prefetch=0,
            grid=grid,
            in_specs=[
                row_tiled((tn_eff, C)),       # point_code
                row_tiled((tn_eff, 3)),       # dirs
                whole((K, 2 * HIDDEN)),       # fused stage-1 weight
                whole((1, 2 * HIDDEN)),       # fused stage-1 bias
                whole((8, 2 * HIDDEN)),       # fused stage-2 weight (transposed)
                whole((8, 1)),                # fused stage-2 bias (column)
            ],
            out_specs=pl.BlockSpec((4, tn_eff), lambda i: (0, i)),
        ),
        compiler_params=pltpu.CompilerParams(
            dimension_semantics=("parallel",),
            vmem_limit_bytes=32 * 1024 * 1024),
    )(point_code, dirs, w1, b1, w2t, b2)

    sigmas = packed[0]                 # (N,)
    rgbs = jnp.transpose(packed[1:4])  # (N, 3) — layout plumbing in the wrapper
    return sigmas, rgbs


# ----------------------------- reference (plain JAX) -------------------------
def _silu(x):
    return x * jax.nn.sigmoid(x)


def _sh_encode_ref(d):
    x, y, z = d[..., 0:1], d[..., 1:2], d[..., 2:3]
    return jnp.concatenate([
        jnp.full_like(x, C0), -C1 * y, C1 * z, -C1 * x,
        C2[0] * x * y, C2[1] * y * z, C2[2] * (2.0 * z * z - x * x - y * y),
        C2[3] * x * z, C2[4] * (x * x - y * y)], axis=-1)


def common_decoder_ref(point_code, dirs, p):
    base = point_code @ p["wb"] + p["bb"]
    h = _silu(base)
    sigmas = jnp.exp(h @ p["wd"] + p["bd"])[..., 0]
    sh = _sh_encode_ref(dirs)
    color_in = _silu(base + sh @ p["wdir"] + p["bdir"])
    rgb = jax.nn.sigmoid(color_in @ p["wc"] + p["bc"])
    rgb = rgb * (1.0 + 2.0 * SIGMOID_SATURATION) - SIGMOID_SATURATION
    return sigmas, rgb


# ----------------------------- parameter init --------------------------------
def _xavier_uniform(key, fan_in, fan_out):
    bound = (6.0 / (fan_in + fan_out)) ** 0.5
    return jax.random.uniform(key, (fan_in, fan_out), jnp.float32, -bound, bound)


def init_params(key, point_channels):
    ks = jax.random.split(key, 8)
    # NOTE: the module's init_weights() zeroes dir_net; we use small nonzero
    # values so the dir/SH path of the kernel is actually exercised.
    return {
        "wb": _xavier_uniform(ks[0], point_channels, HIDDEN),
        "bb": 0.01 * jax.random.normal(ks[1], (HIDDEN,), jnp.float32),
        "wd": _xavier_uniform(ks[2], HIDDEN, 1),
        "bd": 0.01 * jax.random.normal(ks[3], (1,), jnp.float32),
        "wdir": _xavier_uniform(ks[4], 9, HIDDEN),
        "bdir": 0.01 * jax.random.normal(ks[5], (HIDDEN,), jnp.float32),
        "wc": _xavier_uniform(ks[6], HIDDEN, 3),
        "bc": 0.01 * jax.random.normal(ks[7], (3,), jnp.float32),
    }


if __name__ == "__main__":
    key = jax.random.PRNGKey(0)
    k_pc, k_dir, k_par = jax.random.split(key, 3)

    N, POINT_CHANNELS = 1000, 16
    point_code = jax.random.normal(k_pc, (N, POINT_CHANNELS), jnp.float32)
    dirs = jax.random.normal(k_dir, (N, 3), jnp.float32)
    dirs = dirs / jnp.linalg.norm(dirs, axis=-1, keepdims=True)
    params = init_params(k_par, POINT_CHANNELS)

    sig_ref, rgb_ref = common_decoder_ref(point_code, dirs, params)

    # f32 path with a small tile: exercises multi-tile grid + ragged tail.
    sigmas, rgbs = common_decoder_forward(point_code, [dirs], params, tn=256)
    jax.block_until_ready((sigmas, rgbs))
    assert sigmas.shape == (N,) and rgbs.shape == (N, 3)
    assert jnp.allclose(sigmas, sig_ref, rtol=1e-4, atol=1e-4)
    assert jnp.allclose(rgbs, rgb_ref, rtol=1e-4, atol=1e-4)

    # bf16 storage/matmul path (v6e/v7x feedback), default (large) tile;
    # elementwise math stays f32 inside the kernel -> loose tolerance only
    # from bf16 rounding of inputs/weights.
    pc_bf = point_code.astype(jnp.bfloat16)
    dirs_bf = dirs.astype(jnp.bfloat16)
    params_bf = {k: v.astype(jnp.bfloat16) for k, v in params.items()}
    sig_bf, rgb_bf = common_decoder_forward(pc_bf, [dirs_bf], params_bf)
    jax.block_until_ready((sig_bf, rgb_bf))
    assert jnp.allclose(sig_bf, sig_ref, rtol=5e-2, atol=5e-2)
    assert jnp.allclose(rgb_bf, rgb_ref, rtol=5e-2, atol=5e-2)

    print("KERNEL_OK")
</pallas_src>

<mosaic_0001>
module attributes {stable_mosaic.version = 11 : i64} {
  func.func @common_decoder_kernel(%arg0: i32, %arg1: memref<256x16xf32, #tpu.memory_space<vmem>>, %arg2: memref<256x3xf32, #tpu.memory_space<vmem>>, %arg3: memref<24x128xf32, #tpu.memory_space<vmem>>, %arg4: memref<1x128xf32, #tpu.memory_space<vmem>>, %arg5: memref<8x128xf32, #tpu.memory_space<vmem>>, %arg6: memref<8x1xf32, #tpu.memory_space<vmem>>, %arg7: memref<4x256xf32, #tpu.memory_space<vmem>>) attributes {dimension_semantics = [#tpu.dimension_semantics<parallel>], iteration_bounds = array<i64: 4>, scalar_prefetch = 0 : i64, scratch_operands = 0 : i64, tpu.core_type = #tpu.core_type<tc>, window_params = [{transform_indices = @transform_0, window_bounds = array<i64: 256, 16>}, {transform_indices = @transform_1, window_bounds = array<i64: 256, 3>}, {pipeline_mode = #tpu.pipeline_mode<synchronous>, transform_indices = @transform_2, window_bounds = array<i64: 24, 128>}, {pipeline_mode = #tpu.pipeline_mode<synchronous>, transform_indices = @transform_3, window_bounds = array<i64: 1, 128>}, {pipeline_mode = #tpu.pipeline_mode<synchronous>, transform_indices = @transform_4, window_bounds = array<i64: 8, 128>}, {pipeline_mode = #tpu.pipeline_mode<synchronous>, transform_indices = @transform_5, window_bounds = array<i64: 8, 1>}, {transform_indices = @transform_6, window_bounds = array<i64: 4, 256>}]} {
    %c0 = arith.constant 0 : index
    %c0_0 = arith.constant 0 : index
    %0 = vector.load %arg1[%c0, %c0_0] : memref<256x16xf32, #tpu.memory_space<vmem>>, vector<256x16xf32>
    %c0_1 = arith.constant 0 : index
    %c0_2 = arith.constant 0 : index
    %1 = vector.load %arg2[%c0_1, %c0_2] : memref<256x3xf32, #tpu.memory_space<vmem>>, vector<256x3xf32>
    %2 = vector.extract_strided_slice %1 {offsets = [0, 0], sizes = [256, 1], strides = [1, 1]} : vector<256x3xf32> to vector<256x1xf32>
    %3 = vector.extract_strided_slice %1 {offsets = [0, 1], sizes = [256, 1], strides = [1, 1]} : vector<256x3xf32> to vector<256x1xf32>
    %4 = vector.extract_strided_slice %1 {offsets = [0, 2], sizes = [256, 1], strides = [1, 1]} : vector<256x3xf32> to vector<256x1xf32>
    %5 = arith.mulf %2, %2 : vector<256x1xf32>
    %6 = arith.mulf %3, %3 : vector<256x1xf32>
    %7 = arith.mulf %4, %4 : vector<256x1xf32>
    %cst = arith.constant -0.488602519 : f32
    %8 = vector.broadcast %cst : f32 to vector<256x1xf32>
    %9 = arith.mulf %8, %3 : vector<256x1xf32>
    %cst_3 = arith.constant 0.488602519 : f32
    %10 = vector.broadcast %cst_3 : f32 to vector<256x1xf32>
    %11 = arith.mulf %10, %4 : vector<256x1xf32>
    %cst_4 = arith.constant -0.488602519 : f32
    %12 = vector.broadcast %cst_4 : f32 to vector<256x1xf32>
    %13 = arith.mulf %12, %2 : vector<256x1xf32>
    %14 = arith.mulf %2, %3 : vector<256x1xf32>
    %cst_5 = arith.constant 1.09254849 : f32
    %15 = vector.broadcast %cst_5 : f32 to vector<256x1xf32>
    %16 = arith.mulf %15, %14 : vector<256x1xf32>
    %17 = arith.mulf %3, %4 : vector<256x1xf32>
    %cst_6 = arith.constant -1.09254849 : f32
    %18 = vector.broadcast %cst_6 : f32 to vector<256x1xf32>
    %19 = arith.mulf %18, %17 : vector<256x1xf32>
    %cst_7 = arith.constant 2.000000e+00 : f32
    %20 = vector.broadcast %cst_7 : f32 to vector<256x1xf32>
    %21 = arith.mulf %20, %7 : vector<256x1xf32>
    %22 = arith.subf %21, %5 : vector<256x1xf32>
    %23 = arith.subf %22, %6 : vector<256x1xf32>
    %cst_8 = arith.constant 0.31539157 : f32
    %24 = vector.broadcast %cst_8 : f32 to vector<256x1xf32>
    %25 = arith.mulf %24, %23 : vector<256x1xf32>
    %26 = arith.mulf %2, %4 : vector<256x1xf32>
    %cst_9 = arith.constant -1.09254849 : f32
    %27 = vector.broadcast %cst_9 : f32 to vector<256x1xf32>
    %28 = arith.mulf %27, %26 : vector<256x1xf32>
    %29 = arith.subf %5, %6 : vector<256x1xf32>
    %cst_10 = arith.constant 0.546274245 : f32
    %30 = vector.broadcast %cst_10 : f32 to vector<256x1xf32>
    %31 = arith.mulf %30, %29 : vector<256x1xf32>
    %32 = tpu.concatenate %0, %9, %11, %13, %16, %19, %25, %28, %31 in 1 : vector<256x16xf32>, vector<256x1xf32>, vector<256x1xf32>, vector<256x1xf32>, vector<256x1xf32>, vector<256x1xf32>, vector<256x1xf32>, vector<256x1xf32>, vector<256x1xf32> -> vector<256x24xf32>
    %c0_11 = arith.constant 0 : index
    %c0_12 = arith.constant 0 : index
    %33 = vector.load %arg3[%c0_11, %c0_12] : memref<24x128xf32, #tpu.memory_space<vmem>>, vector<24x128xf32>
    %cst_13 = arith.constant dense<0.000000e+00> : vector<256x128xf32>
    %34 = tpu.matmul %32, %33, %cst_13 {dimension_numbers = #tpu.dot_dimension_numbers<[1], [0], [0], [1], [0, 0, 1, 1], [], []>} : vector<256x24xf32>, vector<24x128xf32>, vector<256x128xf32> -> vector<256x128xf32>
    %c0_14 = arith.constant 0 : index
    %c0_15 = arith.constant 0 : index
    %35 = vector.load %arg4[%c0_14, %c0_15] : memref<1x128xf32, #tpu.memory_space<vmem>>, vector<1x128xf32>
    %36 = vector.broadcast %35 : vector<1x128xf32> to vector<256x128xf32>
    %37 = arith.addf %34, %36 : vector<256x128xf32>
    %38 = arith.negf %37 : vector<256x128xf32>
    %39 = math.exp %38 : vector<256x128xf32>
    %cst_16 = arith.constant 1.000000e+00 : f32
    %40 = vector.broadcast %cst_16 : f32 to vector<256x128xf32>
    %41 = arith.addf %40, %39 : vector<256x128xf32>
    %42 = arith.divf %40, %41 : vector<256x128xf32>
    %43 = arith.mulf %37, %42 : vector<256x128xf32>
    %c0_17 = arith.constant 0 : index
    %c0_18 = arith.constant 0 : index
    %44 = vector.load %arg5[%c0_17, %c0_18] : memref<8x128xf32, #tpu.memory_space<vmem>>, vector<8x128xf32>
    %cst_19 = arith.constant dense<0.000000e+00> : vector<8x256xf32>
    %45 = tpu.matmul %44, %43, %cst_19 {dimension_numbers = #tpu.dot_dimension_numbers<[1], [1], [0], [0], [0, 0, 1, 0], [], []>} : vector<8x128xf32>, vector<256x128xf32>, vector<8x256xf32> -> vector<8x256xf32>
    %c0_20 = arith.constant 0 : index
    %c0_21 = arith.constant 0 : index
    %46 = vector.load %arg6[%c0_20, %c0_21] : memref<8x1xf32, #tpu.memory_space<vmem>>, vector<8x1xf32>
    %47 = vector.broadcast %46 : vector<8x1xf32> to vector<8x256xf32>
    %48 = arith.addf %45, %47 : vector<8x256xf32>
    %49 = tpu.iota {dimensions = array<i32: 0>} : vector<8x256xi32>
    %c0_i32 = arith.constant 0 : i32
    %50 = vector.broadcast %c0_i32 : i32 to vector<8x256xi32>
    %51 = arith.cmpi eq, %49, %50 : vector<8x256xi32>
    %52 = math.exp %48 : vector<8x256xf32>
    %53 = arith.negf %48 : vector<8x256xf32>
    %54 = math.exp %53 : vector<8x256xf32>
    %cst_22 = arith.constant 1.000000e+00 : f32
    %55 = vector.broadcast %cst_22 : f32 to vector<8x256xf32>
    %56 = arith.addf %55, %54 : vector<8x256xf32>
    %57 = arith.divf %55, %56 : vector<8x256xf32>
    %cst_23 = arith.constant 1.002000e+00 : f32
    %58 = vector.broadcast %cst_23 : f32 to vector<8x256xf32>
    %59 = arith.mulf %57, %58 : vector<8x256xf32>
    %cst_24 = arith.constant 1.000000e-03 : f32
    %60 = vector.broadcast %cst_24 : f32 to vector<8x256xf32>
    %61 = arith.subf %59, %60 : vector<8x256xf32>
    %62 = arith.select %51, %52, %61 : vector<8x256xi1>, vector<8x256xf32>
    %63 = vector.extract_strided_slice %62 {offsets = [0, 0], sizes = [4, 256], strides = [1, 1]} : vector<8x256xf32> to vector<4x256xf32>
    %c0_25 = arith.constant 0 : index
    %c0_26 = arith.constant 0 : index
    %64 = vector.load %arg7[%c0_25, %c0_26] : memref<4x256xf32, #tpu.memory_space<vmem>>, vector<4x256xf32>
    tpu.vector_store %arg7[%c0_25, %c0_26], %63 {strides = array<i32>} : memref<4x256xf32, #tpu.memory_space<vmem>>, vector<4x256xf32>,
    return
  }
  func.func @transform_0(%arg0: i32) -> (i32, i32) {
    %c0_i32 = arith.constant 0 : i32
    %c0_i32_0 = arith.constant 0 : i32
    return %arg0, %c0_i32 : i32, i32
  }
  func.func @transform_1(%arg0: i32) -> (i32, i32) {
    %c0_i32 = arith.constant 0 : i32
    %c0_i32_0 = arith.constant 0 : i32
    return %arg0, %c0_i32 : i32, i32
  }
  func.func @transform_2(%arg0: i32) -> (i32, i32) {
    %c0_i32 = arith.constant 0 : i32
    %c0_i32_0 = arith.constant 0 : i32
    %c0_i32_1 = arith.constant 0 : i32
    return %c0_i32, %c0_i32_0 : i32, i32
  }
  func.func @transform_3(%arg0: i32) -> (i32, i32) {
    %c0_i32 = arith.constant 0 : i32
    %c0_i32_0 = arith.constant 0 : i32
    %c0_i32_1 = arith.constant 0 : i32
    return %c0_i32, %c0_i32_0 : i32, i32
  }
  func.func @transform_4(%arg0: i32) -> (i32, i32) {
    %c0_i32 = arith.constant 0 : i32
    %c0_i32_0 = arith.constant 0 : i32
    %c0_i32_1 = arith.constant 0 : i32
    return %c0_i32, %c0_i32_0 : i32, i32
  }
  func.func @transform_5(%arg0: i32) -> (i32, i32) {
    %c0_i32 = arith.constant 0 : i32
    %c0_i32_0 = arith.constant 0 : i32
    %c0_i32_1 = arith.constant 0 : i32
    return %c0_i32, %c0_i32_0 : i32, i32
  }
  func.func @transform_6(%arg0: i32) -> (i32, i32) {
    %c0_i32 = arith.constant 0 : i32
    %c0_i32_0 = arith.constant 0 : i32
    return %c0_i32, %arg0 : i32, i32
  }
}

</mosaic_0001>

<llo_original>
// kernel: tpu_custom_call.1
$region0: #{tpu_custom_call.1}
  #allocation0 [shape = 'u32[]', space=smem, size = 0x4, offset = 0x4, fixed_abs, tag = 'smem constant byte address 0x4 - core index']
  #allocation1 [shape = 'u32[144,128]{1,0:T(1,128)}', space=vmem, size = 0x12000, scoped, tag = 'internal scratch']
  %s0 = inlined_call_operand.vmem [shape: f32[1000,16], index: 0, kind: input, shape index: {}]
  %s1 = inlined_call_operand.vmem [shape: f32[1000,3], index: 1, kind: input, shape index: {}]
  %s2 = inlined_call_operand.vmem [shape: f32[24,128], index: 2, kind: input, shape index: {}]
  %s3 = inlined_call_operand.vmem [shape: f32[1,128], index: 3, kind: input, shape index: {}]
  %s4 = inlined_call_operand.vmem [shape: f32[8,128], index: 4, kind: input, shape index: {}]
  %s5 = inlined_call_operand.vmem [shape: f32[8,1], index: 5, kind: input, shape index: {}]
  %s6 = inlined_call_operand.hbm [shape: f32[4,1000], index: 6, kind: output, shape index: {}]
  %s7 = sld [smem:[#allocation0]]
  $region57: #{tpu_custom_call.1} parent=0
    _
  %s9 = ssub.s32 1, %s7
  %s10 = scalar_select 0, %s9, %s7
  $region1: #{tpu_custom_call.1} parent=0
    #allocation2 [shape = 'u8[8192]{0}', space=vmem, size = 0x2000, scoped, tag = 'output window, operand 0']
    #allocation3 [shape = 's32[2]{0}', space=sflag, size = 0x8, scoped, tag = 'scoped memory for tpu_custom_call.1']
    %11 = vsyncpa [#allocation3], 0
    %s12 = scalar_lea.sflag [#allocation3], 1
    %13 = vsyncpa %s12, 0
    loop: start=0, step=1, limit=6
    $region2: #{tpu_custom_call.1} parent=1 // loop_pre_header
      _
    $region3: #{tpu_custom_call.1} parent=1 // loop_header
      %s15 = sphi 0, %s19
      %p16 = scmp.ge.s32.totalorder %s15, 6
      %s25 = sphi 0, %s27
      %s28 = sphi 0, %s25
      %s29 = sphi 0, %s28
      %s45 = sphi 0, %s29
      %s51 = sphi 0, %s53
      %s54 = sphi 0, %s51
      %s55 = sphi 0, %s54
      %s71 = sphi 0, %s55
      %s75 = sphi 0, %s75
      %s77 = sphi 0, %s75
      %s78 = sphi 0, %s77
      %s92 = sphi 0, %s78
      %s96 = sphi 0, %s96
      %s98 = sphi 0, %s96
      %s99 = sphi 0, %s98
      %s113 = sphi 0, %s99
      %s117 = sphi 0, %s117
      %s119 = sphi 0, %s117
      %s120 = sphi 0, %s119
      %s134 = sphi 0, %s120
      %s138 = sphi 0, %s138
      %s140 = sphi 0, %s138
      %s141 = sphi 0, %s140
      %s155 = sphi 0, %s141
      %s161 = sphi 0, %s163
      %s164 = sphi 0, %s161
      %s165 = sphi 0, %s164
      %s181 = sphi 0, %s165
    $region4: #{tpu_custom_call.1} parent=1 // loop_header_branch
      %18 = sbr.rel (%p16) target = $region8
    $region5: #{tpu_custom_call.1} parent=1 // loop_body
      %s20 = ssub.s32 %s15, 1
      %s21 = ssub.s32 %s15, 2
      %s22 = sadd.s32 %s15, 1
      %s23 = ssub.s32 %s15, %s22
      %p24 = scmp.eq.s32.totalorder %s23, 0
      %s26 = sadd.s32 %s25, 1
      %s27 = scalar_select %p24, %s25, %s26
      %p30 = pneg %p24
      %p31 = scmp.eq.s32.totalorder %s15, 3
      %p32 = por %p30, %p31
      %p33 = scmp.ne.s32.totalorder %s25, %s28
      %p34 = scmp.eq.s32.totalorder %s15, 0
      %p35 = por %p33, %p34
      %p36 = scmp.ne.s32.totalorder %s25, %s28
      %p37 = scmp.eq.s32.totalorder %s20, 3
      %p38 = por %p36, %p37
      %p39 = scmp.ne.s32.totalorder %s28, %s29
      %p40 = scmp.eq.s32.totalorder %s20, 0
      %p41 = por %p39, %p40
      %p42 = scmp.ne.s32.totalorder %s28, %s29
      %p43 = scmp.eq.s32.totalorder %s21, 3
      %p44 = por %p42, %p43
      %p46 = scmp.ne.s32.totalorder %s29, %s45
      %p47 = scmp.eq.s32.totalorder %s21, 0
      %p48 = por %p46, %p47
      %s49 = ssub.s32 %s15, %s22
      %p50 = scmp.eq.s32.totalorder %s49, 0
      %s52 = sadd.s32 %s51, 1
      %s53 = scalar_select %p50, %s51, %s52
      %p56 = pneg %p50
      %p57 = scmp.eq.s32.totalorder %s15, 3
      %p58 = por %p56, %p57
      %p59 = scmp.ne.s32.totalorder %s51, %s54
      %p60 = scmp.eq.s32.totalorder %s15, 0
      %p61 = por %p59, %p60
      %p62 = scmp.ne.s32.totalorder %s51, %s54
      %p63 = scmp.eq.s32.totalorder %s20, 3
      %p64 = por %p62, %p63
      %p65 = scmp.ne.s32.totalorder %s54, %s55
      %p66 = scmp.eq.s32.totalorder %s20, 0
      %p67 = por %p65, %p66
      %p68 = scmp.ne.s32.totalorder %s54, %s55
      %p69 = scmp.eq.s32.totalorder %s21, 3
      %p70 = por %p68, %p69
      %p72 = scmp.ne.s32.totalorder %s55, %s71
      %p73 = scmp.eq.s32.totalorder %s21, 0
      %p74 = por %p72, %p73
      %s76 = sadd.s32 %s75, 1
      %p79 = scmp.eq.s32.totalorder %s15, 3
      %p80 = scmp.ne.s32.totalorder %s75, %s77
      %p81 = scmp.eq.s32.totalorder %s15, 0
      %p82 = por %p80, %p81
      %p83 = scmp.ne.s32.totalorder %s75, %s77
      %p84 = scmp.eq.s32.totalorder %s20, 3
      %p85 = por %p83, %p84
      %p86 = scmp.ne.s32.totalorder %s77, %s78
      %p87 = scmp.eq.s32.totalorder %s20, 0
      %p88 = por %p86, %p87
      %p89 = scmp.ne.s32.totalorder %s77, %s78
      %p90 = scmp.eq.s32.totalorder %s21, 3
      %p91 = por %p89, %p90
      %p93 = scmp.ne.s32.totalorder %s78, %s92
      %p94 = scmp.eq.s32.totalorder %s21, 0
      %p95 = por %p93, %p94
      %s97 = sadd.s32 %s96, 1
      %p100 = scmp.eq.s32.totalorder %s15, 3
      %p101 = scmp.ne.s32.totalorder %s96, %s98
      %p102 = scmp.eq.s32.totalorder %s15, 0
      %p103 = por %p101, %p102
      %p104 = scmp.ne.s32.totalorder %s96, %s98
      %p105 = scmp.eq.s32.totalorder %s20, 3
      %p106 = por %p104, %p105
      %p107 = scmp.ne.s32.totalorder %s98, %s99
      %p108 = scmp.eq.s32.totalorder %s20, 0
      %p109 = por %p107, %p108
      %p110 = scmp.ne.s32.totalorder %s98, %s99
      %p111 = scmp.eq.s32.totalorder %s21, 3
      %p112 = por %p110, %p111
      %p114 = scmp.ne.s32.totalorder %s99, %s113
      %p115 = scmp.eq.s32.totalorder %s21, 0
      %p116 = por %p114, %p115
      %s118 = sadd.s32 %s117, 1
      %p121 = scmp.eq.s32.totalorder %s15, 3
      %p122 = scmp.ne.s32.totalorder %s117, %s119
      %p123 = scmp.eq.s32.totalorder %s15, 0
      %p124 = por %p122, %p123
      %p125 = scmp.ne.s32.totalorder %s117, %s119
      %p126 = scmp.eq.s32.totalorder %s20, 3
      %p127 = por %p125, %p126
      %p128 = scmp.ne.s32.totalorder %s119, %s120
      %p129 = scmp.eq.s32.totalorder %s20, 0
      %p130 = por %p128, %p129
      %p131 = scmp.ne.s32.totalorder %s119, %s120
      %p132 = scmp.eq.s32.totalorder %s21, 3
      %p133 = por %p131, %p132
      %p135 = scmp.ne.s32.totalorder %s120, %s134
      %p136 = scmp.eq.s32.totalorder %s21, 0
      %p137 = por %p135, %p136
      %s139 = sadd.s32 %s138, 1
      %p142 = scmp.eq.s32.totalorder %s15, 3
      %p143 = scmp.ne.s32.totalorder %s138, %s140
      %p144 = scmp.eq.s32.totalorder %s15, 0
      %p145 = por %p143, %p144
      %p146 = scmp.ne.s32.totalorder %s138, %s140
      %p147 = scmp.eq.s32.totalorder %s20, 3
      %p148 = por %p146, %p147
      %p149 = scmp.ne.s32.totalorder %s140, %s141
      %p150 = scmp.eq.s32.totalorder %s20, 0
      %p151 = por %p149, %p150
      %p152 = scmp.ne.s32.totalorder %s140, %s141
      %p153 = scmp.eq.s32.totalorder %s21, 3
      %p154 = por %p152, %p153
      %p156 = scmp.ne.s32.totalorder %s141, %s155
      %p157 = scmp.eq.s32.totalorder %s21, 0
      %p158 = por %p156, %p157
      %s159 = ssub.s32 %s15, %s22
      %p160 = scmp.eq.s32.totalorder %s159, 0
      %s162 = sadd.s32 %s161, 1
      %s163 = scalar_select %p160, %s161, %s162
      %p166 = pneg %p160
      %p167 = scmp.eq.s32.totalorder %s15, 3
      %p168 = por %p166, %p167
      %p169 = scmp.ne.s32.totalorder %s161, %s164
      %p170 = scmp.eq.s32.totalorder %s15, 0
      %p171 = por %p169, %p170
      %p172 = scmp.ne.s32.totalorder %s161, %s164
      %p173 = scmp.eq.s32.totalorder %s20, 3
      %p174 = por %p172, %p173
      %p175 = scmp.ne.s32.totalorder %s164, %s165
      %p176 = scmp.eq.s32.totalorder %s20, 0
      %p177 = por %p175, %p176
      %p178 = scmp.ne.s32.totalorder %s164, %s165
      %p179 = scmp.eq.s32.totalorder %s21, 3
      %p180 = por %p178, %p179
      %p182 = scmp.ne.s32.totalorder %s165, %s181
      %p183 = scmp.eq.s32.totalorder %s21, 0
      %p184 = por %p182, %p183
      %p185 = scmp.le.s32.totalorder 1, %s15
      %p186 = scmp.lt.s32.totalorder %s15, 5
      %p187 = pnand %p185, %p186
      %p188 = pneg %p187
      // Predicated region
      $region9: #{tpu_custom_call.1} parent=5 // pred_check
        _
      $region10: #{tpu_custom_call.1} parent=5 // pred_check_branch
        %190 = sbr.rel (%p187) target = $region12
      $region11: #{tpu_custom_call.1} parent=5 // pred_region
        %s191 = ssub.s32 %s15, 1
        // Predicated region
        $region13: #{tpu_custom_call.1} parent=11 // pred_check
          %p192 = pneg %p88
        $region14: #{tpu_custom_call.1} parent=11 // pred_check_branch
          %194 = sbr.rel (%p192) target = $region16
        $region15: #{tpu_custom_call.1} parent=11 // pred_region
          _
        $region16: #{tpu_custom_call.1} parent=11 // pred_fallthru
          _
        // Predicated region
        $region17: #{tpu_custom_call.1} parent=11 // pred_check
          %p195 = pneg %p109
        $region18: #{tpu_custom_call.1} parent=11 // pred_check_branch
          %197 = sbr.rel (%p195) target = $region20
        $region19: #{tpu_custom_call.1} parent=11 // pred_region
          _
        $region20: #{tpu_custom_call.1} parent=11 // pred_fallthru
          _
        // Predicated region
        $region21: #{tpu_custom_call.1} parent=11 // pred_check
          %p198 = pneg %p130
        $region22: #{tpu_custom_call.1} parent=11 // pred_check_branch
          %200 = sbr.rel (%p198) target = $region24
        $region23: #{tpu_custom_call.1} parent=11 // pred_region
          _
        $region24: #{tpu_custom_call.1} parent=11 // pred_fallthru
          _
        // Predicated region
        $region25: #{tpu_custom_call.1} parent=11 // pred_check
          %p201 = pneg %p151
        $region26: #{tpu_custom_call.1} parent=11 // pred_check_branch
          %203 = sbr.rel (%p201) target = $region28
        $region27: #{tpu_custom_call.1} parent=11 // pred_region
          _
        $region28: #{tpu_custom_call.1} parent=11 // pred_fallthru
          _
      $region12: #{tpu_custom_call.1} parent=5 // pred_fallthru
        _
      %p204 = scmp.lt.s32.totalorder %s15, 4
      // Predicated region
      $region29: #{tpu_custom_call.1} parent=5 // pred_check
        %p205 = pneg %p204
      $region30: #{tpu_custom_call.1} parent=5 // pred_check_branch
        %207 = sbr.rel (%p205) target = $region32
      $region31: #{tpu_custom_call.1} parent=5 // pred_region
        // Predicated region
        $region33: #{tpu_custom_call.1} parent=31 // pred_check
          %p208 = pneg %p35
        $region34: #{tpu_custom_call.1} parent=31 // pred_check_branch
          %210 = sbr.rel (%p208) target = $region36
        $region35: #{tpu_custom_call.1} parent=31 // pred_region
          %s211 = smul.u32 32, %s15
          %s212 = ssub.s32 125, %s211
          %p213 = scmp.lt.s32.totalorder %s212, 32
          %s214 = scalar_select %p213, %s212, 32
          %s215 = smul.u32 128, %s214
          %p216 = scmp.lt.s32.totalorder %s211, 124
          %s217 = scalar_select %p216, %s211, 124
          %s218 = smul.addr %s217, 8
          %s219 = scalar_lea.vmem %s0, %s218
          %s220 = smul.u32 32, %s15
          %s221 = ssub.s32 125, %s220
          %p222 = scmp.lt.s32.totalorder %s221, 32
          %s223 = scalar_select %p222, %s221, 32
          %s224 = smul.u32 128, %s223
        $region36: #{tpu_custom_call.1} parent=31 // pred_fallthru
          _
        // Predicated region
        $region37: #{tpu_custom_call.1} parent=31 // pred_check
          %p225 = pneg %p61
        $region38: #{tpu_custom_call.1} parent=31 // pred_check_branch
          %227 = sbr.rel (%p225) target = $region40
        $region39: #{tpu_custom_call.1} parent=31 // pred_region
          %s228 = smul.u32 32, %s15
          %s229 = ssub.s32 125, %s228
          %p230 = scmp.lt.s32.totalorder %s229, 32
          %s231 = scalar_select %p230, %s229, 32
          %s232 = smul.u32 128, %s231
          %p233 = scmp.lt.s32.totalorder %s228, 124
          %s234 = scalar_select %p233, %s228, 124
          %s235 = smul.addr %s234, 8
          %s236 = scalar_lea.vmem %s1, %s235
          %s237 = smul.u32 32, %s15
          %s238 = ssub.s32 125, %s237
          %p239 = scmp.lt.s32.totalorder %s238, 32
          %s240 = scalar_select %p239, %s238, 32
          %s241 = smul.u32 128, %s240
        $region40: #{tpu_custom_call.1} parent=31 // pred_fallthru
          _
      $region32: #{tpu_custom_call.1} parent=5 // pred_fallthru
        _
      %p242 = scmp.le.s32.totalorder 1, %s15
      %p243 = scmp.lt.s32.totalorder %s15, 5
      %p244 = pnand %p242, %p243
      %p245 = pneg %p244
      // Predicated region
      $region41: #{tpu_custom_call.1} parent=5 // pred_check
        _
      $region42: #{tpu_custom_call.1} parent=5 // pred_check_branch
        %247 = sbr.rel (%p244) target = $region44
      $region43: #{tpu_custom_call.1} parent=5 // pred_region
        %s248 = ssub.s32 %s15, 1
        %s249 = smul.u32 32, %s20
        %s250 = ssub.s32 125, %s249
        %p251 = scmp.lt.s32.totalorder %s250, 32
        %s252 = scalar_select %p251, %s250, 32
        %s253 = smul.u32 128, %s252
        %p254 = scmp.lt.s32.totalorder %s249, 124
        %s255 = scalar_select %p254, %s249, 124
        %s256 = smul.addr %s255, 8
        %s257 = scalar_lea.vmem %s0, %s256
        %p258 = pneg %p41
        %p259 = pneg %p38
        %s260 = smul.u32 32, %s20
        %s261 = ssub.s32 125, %s260
        %p262 = scmp.lt.s32.totalorder %s261, 32
        %s263 = scalar_select %p262, %s261, 32
        %s264 = smul.u32 128, %s263
        %p265 = scmp.lt.s32.totalorder %s260, 124
        %s266 = scalar_select %p265, %s260, 124
        %s267 = smul.addr %s266, 8
        %s268 = scalar_lea.vmem %s1, %s267
        %p269 = pneg %p67
        %p270 = pneg %p64
        %p271 = pneg %p88
        %p272 = pneg %p85
        %p273 = pneg %p109
        %p274 = pneg %p106
        %p275 = pneg %p130
        %p276 = pneg %p127
        %p277 = pneg %p151
        %p278 = pneg %p148
        %p279 = pneg %p177
        %p280 = pneg %p174
        %s281 = sand.u32 %s164, 1
        %s282 = scalar_lea.sflag [#allocation3], %s281
        %s283 = sand.u32 %s164, 1
        %s284 = smul.addr %s283, 8
        %s285 = scalar_lea.vmem [#allocation2], %s284
        %s286 = smul.u32 32, %s20
        %s287 = ssub.s32 125, %s286
        %p288 = scmp.lt.s32.totalorder %s287, 32
        %s289 = scalar_select %p288, %s287, 32
        %s290 = smul.u32 128, %s289
        %p291 = scmp.lt.s32.totalorder %s286, 124
        %s292 = scalar_select %p291, %s286, 124
        %s293 = smul.addr %s292, 8
        %s294 = scalar_lea.vmem %s0, %s293
        %s295 = smul.u32 32, %s20
        %s296 = ssub.s32 125, %s295
        %p297 = scmp.lt.s32.totalorder %s296, 32
        %s298 = scalar_select %p297, %s296, 32
        %s299 = smul.u32 128, %s298
        %s300 = smul.u32 32, %s20
        %s301 = ssub.s32 125, %s300
        %p302 = scmp.lt.s32.totalorder %s301, 32
        %s303 = scalar_select %p302, %s301, 32
        %s304 = smul.u32 128, %s303
        %p305 = scmp.lt.s32.totalorder %s300, 124
        %s306 = scalar_select %p305, %s300, 124
        %s307 = smul.addr %s306, 8
        %s308 = scalar_lea.vmem %s1, %s307
        %s309 = smul.u32 32, %s20
        %s310 = ssub.s32 125, %s309
        %p311 = scmp.lt.s32.totalorder %s310, 32
        %s312 = scalar_select %p311, %s310, 32
        %s313 = smul.u32 128, %s312
        %s314 = smul.u32 2, %s20
        %v315 = vld [vmem:[%s294] sm:$0xff]
        %v316 = vld [vmem:[%s294 + $0x8] sm:$0xff]
        %v317 = vld [vmem:[%s294 + $0x10] sm:$0xff]
        %v318 = vld [vmem:[%s294 + $0x18] sm:$0xff]
        %v319 = vld [vmem:[%s294 + $0x20] sm:$0xff]
        %v320 = vld [vmem:[%s294 + $0x28] sm:$0xff]
        %v321 = vld [vmem:[%s294 + $0x30] sm:$0xff]
        %v322 = vld [vmem:[%s294 + $0x38] sm:$0xff]
        %v323 = vld [vmem:[%s294 + $0x40] sm:$0xff]
        %v324 = vld [vmem:[%s294 + $0x48] sm:$0xff]
        %v325 = vld [vmem:[%s294 + $0x50] sm:$0xff]
        %v326 = vld [vmem:[%s294 + $0x58] sm:$0xff]
        %v327 = vld [vmem:[%s294 + $0x60] sm:$0xff]
        %v328 = vld [vmem:[%s294 + $0x68] sm:$0xff]
        %v329 = vld [vmem:[%s294 + $0x70] sm:$0xff]
        %v330 = vld [vmem:[%s294 + $0x78] sm:$0xff]
        %v331 = vld [vmem:[%s294 + $0x80] sm:$0xff]
        %v332 = vld [vmem:[%s294 + $0x88] sm:$0xff]
        %v333 = vld [vmem:[%s294 + $0x90] sm:$0xff]
        %v334 = vld [vmem:[%s294 + $0x98] sm:$0xff]
        %v335 = vld [vmem:[%s294 + $0xa0] sm:$0xff]
        %v336 = vld [vmem:[%s294 + $0xa8] sm:$0xff]
        %v337 = vld [vmem:[%s294 + $0xb0] sm:$0xff]
        %v338 = vld [vmem:[%s294 + $0xb8] sm:$0xff]
        %v339 = vld [vmem:[%s294 + $0xc0] sm:$0xff]
        %v340 = vld [vmem:[%s294 + $0xc8] sm:$0xff]
        %v341 = vld [vmem:[%s294 + $0xd0] sm:$0xff]
        %v342 = vld [vmem:[%s294 + $0xd8] sm:$0xff]
        %v343 = vld [vmem:[%s294 + $0xe0] sm:$0xff]
        %v344 = vld [vmem:[%s294 + $0xe8] sm:$0xff]
        %v345 = vld [vmem:[%s294 + $0xf0] sm:$0xff]
        %v346 = vld [vmem:[%s294 + $0xf8] sm:$0xff]
        %v347 = vld [vmem:[%s308] sm:$0xff]
        %v348 = vld [vmem:[%s308 + $0x8] sm:$0xff]
        %v349 = vld [vmem:[%s308 + $0x10] sm:$0xff]
        %v350 = vld [vmem:[%s308 + $0x18] sm:$0xff]
        %v351 = vld [vmem:[%s308 + $0x20] sm:$0xff]
        %v352 = vld [vmem:[%s308 + $0x28] sm:$0xff]
        %v353 = vld [vmem:[%s308 + $0x30] sm:$0xff]
        %v354 = vld [vmem:[%s308 + $0x38] sm:$0xff]
        %v355 = vld [vmem:[%s308 + $0x40] sm:$0xff]
        %v356 = vld [vmem:[%s308 + $0x48] sm:$0xff]
        %v357 = vld [vmem:[%s308 + $0x50] sm:$0xff]
        %v358 = vld [vmem:[%s308 + $0x58] sm:$0xff]
        %v359 = vld [vmem:[%s308 + $0x60] sm:$0xff]
        %v360 = vld [vmem:[%s308 + $0x68] sm:$0xff]
        %v361 = vld [vmem:[%s308 + $0x70] sm:$0xff]
        %v362 = vld [vmem:[%s308 + $0x78] sm:$0xff]
        %v363 = vld [vmem:[%s308 + $0x80] sm:$0xff]
        %v364 = vld [vmem:[%s308 + $0x88] sm:$0xff]
        %v365 = vld [vmem:[%s308 + $0x90] sm:$0xff]
        %v366 = vld [vmem:[%s308 + $0x98] sm:$0xff]
        %v367 = vld [vmem:[%s308 + $0xa0] sm:$0xff]
        %v368 = vld [vmem:[%s308 + $0xa8] sm:$0xff]
        %v369 = vld [vmem:[%s308 + $0xb0] sm:$0xff]
        %v370 = vld [vmem:[%s308 + $0xb8] sm:$0xff]
        %v371 = vld [vmem:[%s308 + $0xc0] sm:$0xff]
        %v372 = vld [vmem:[%s308 + $0xc8] sm:$0xff]
        %v373 = vld [vmem:[%s308 + $0xd0] sm:$0xff]
        %v374 = vld [vmem:[%s308 + $0xd8] sm:$0xff]
        %v375 = vld [vmem:[%s308 + $0xe0] sm:$0xff]
        %v376 = vld [vmem:[%s308 + $0xe8] sm:$0xff]
        %v377 = vld [vmem:[%s308 + $0xf0] sm:$0xff]
        %v378 = vld [vmem:[%s308 + $0xf8] sm:$0xff]
        %v379 = vmul.f32 %v347, %v347
        %v380 = vmul.f32 %v348, %v348
        %v381 = vmul.f32 %v349, %v349
        %v382 = vmul.f32 %v350, %v350
        %v383 = vmul.f32 %v351, %v351
        %v384 = vmul.f32 %v352, %v352
        %v385 = vmul.f32 %v353, %v353
        %v386 = vmul.f32 %v354, %v354
        %v387 = vmul.f32 %v355, %v355
        %v388 = vmul.f32 %v356, %v356
        %v389 = vmul.f32 %v357, %v357
        %v390 = vmul.f32 %v358, %v358
        %v391 = vmul.f32 %v359, %v359
        %v392 = vmul.f32 %v360, %v360
        %v393 = vmul.f32 %v361, %v361
        %v394 = vmul.f32 %v362, %v362
        %v395 = vmul.f32 %v363, %v363
        %v396 = vmul.f32 %v364, %v364
        %v397 = vmul.f32 %v365, %v365
        %v398 = vmul.f32 %v366, %v366
        %v399 = vmul.f32 %v367, %v367
        %v400 = vmul.f32 %v368, %v368
        %v401 = vmul.f32 %v369, %v369
        %v402 = vmul.f32 %v370, %v370
        %v403 = vmul.f32 %v371, %v371
        %v404 = vmul.f32 %v372, %v372
        %v405 = vmul.f32 %v373, %v373
        %v406 = vmul.f32 %v374, %v374
        %v407 = vmul.f32 %v375, %v375
        %v408 = vmul.f32 %v376, %v376
        %v409 = vmul.f32 %v377, %v377
        %v410 = vmul.f32 %v378, %v378
        %v411 = vmul.f32 %v347, -0.48860252
        %v412 = vmul.f32 %v348, -0.48860252
        %v413 = vmul.f32 %v349, -0.48860252
        %v414 = vmul.f32 %v350, -0.48860252
        %v415 = vmul.f32 %v351, -0.48860252
        %v416 = vmul.f32 %v352, -0.48860252
        %v417 = vmul.f32 %v353, -0.48860252
        %v418 = vmul.f32 %v354, -0.48860252
        %v419 = vmul.f32 %v355, -0.48860252
        %v420 = vmul.f32 %v356, -0.48860252
        %v421 = vmul.f32 %v357, -0.48860252
        %v422 = vmul.f32 %v358, -0.48860252
        %v423 = vmul.f32 %v359, -0.48860252
        %v424 = vmul.f32 %v360, -0.48860252
        %v425 = vmul.f32 %v361, -0.48860252
        %v426 = vmul.f32 %v362, -0.48860252
        %v427 = vmul.f32 %v363, -0.48860252
        %v428 = vmul.f32 %v364, -0.48860252
        %v429 = vmul.f32 %v365, -0.48860252
        %v430 = vmul.f32 %v366, -0.48860252
        %v431 = vmul.f32 %v367, -0.48860252
        %v432 = vmul.f32 %v368, -0.48860252
        %v433 = vmul.f32 %v369, -0.48860252
        %v434 = vmul.f32 %v370, -0.48860252
        %v435 = vmul.f32 %v371, -0.48860252
        %v436 = vmul.f32 %v372, -0.48860252
        %v437 = vmul.f32 %v373, -0.48860252
        %v438 = vmul.f32 %v374, -0.48860252
        %v439 = vmul.f32 %v375, -0.48860252
        %v440 = vmul.f32 %v376, -0.48860252
        %v441 = vmul.f32 %v377, -0.48860252
        %v442 = vmul.f32 %v378, -0.48860252
        %v443 = vmul.f32 %v347, 0.48860252
        %v444 = vmul.f32 %v348, 0.48860252
        %v445 = vmul.f32 %v349, 0.48860252
        %v446 = vmul.f32 %v350, 0.48860252
        %v447 = vmul.f32 %v351, 0.48860252
        %v448 = vmul.f32 %v352, 0.48860252
        %v449 = vmul.f32 %v353, 0.48860252
        %v450 = vmul.f32 %v354, 0.48860252
        %v451 = vmul.f32 %v355, 0.48860252
        %v452 = vmul.f32 %v356, 0.48860252
        %v453 = vmul.f32 %v357, 0.48860252
        %v454 = vmul.f32 %v358, 0.48860252
        %v455 = vmul.f32 %v359, 0.48860252
        %v456 = vmul.f32 %v360, 0.48860252
        %v457 = vmul.f32 %v361, 0.48860252
        %v458 = vmul.f32 %v362, 0.48860252
        %v459 = vmul.f32 %v363, 0.48860252
        %v460 = vmul.f32 %v364, 0.48860252
        %v461 = vmul.f32 %v365, 0.48860252
        %v462 = vmul.f32 %v366, 0.48860252
        %v463 = vmul.f32 %v367, 0.48860252
        %v464 = vmul.f32 %v368, 0.48860252
        %v465 = vmul.f32 %v369, 0.48860252
        %v466 = vmul.f32 %v370, 0.48860252
        %v467 = vmul.f32 %v371, 0.48860252
        %v468 = vmul.f32 %v372, 0.48860252
        %v469 = vmul.f32 %v373, 0.48860252
        %v470 = vmul.f32 %v374, 0.48860252
        %v471 = vmul.f32 %v375, 0.48860252
        %v472 = vmul.f32 %v376, 0.48860252
        %v473 = vmul.f32 %v377, 0.48860252
        %v474 = vmul.f32 %v378, 0.48860252
        %507 = vrot.lane.b32.xlu0 %v347, 127
        %v508 = vpop.permute.xlu0 %507
        %509 = vrot.lane.b32.xlu0 %v348, 127
        %v510 = vpop.permute.xlu0 %509
        %511 = vrot.lane.b32.xlu0 %v349, 127
        %v512 = vpop.permute.xlu0 %511
        %513 = vrot.lane.b32.xlu0 %v350, 127
        %v514 = vpop.permute.xlu0 %513
        %515 = vrot.lane.b32.xlu0 %v351, 127
        %v516 = vpop.permute.xlu0 %515
        %517 = vrot.lane.b32.xlu0 %v352, 127
        %v518 = vpop.permute.xlu0 %517
        %519 = vrot.lane.b32.xlu0 %v353, 127
        %v520 = vpop.permute.xlu0 %519
        %521 = vrot.lane.b32.xlu0 %v354, 127
        %v522 = vpop.permute.xlu0 %521
        %523 = vrot.lane.b32.xlu0 %v355, 127
        %v524 = vpop.permute.xlu0 %523
        %525 = vrot.lane.b32.xlu0 %v356, 127
        %v526 = vpop.permute.xlu0 %525
        %527 = vrot.lane.b32.xlu0 %v357, 127
        %v528 = vpop.permute.xlu0 %527
        %529 = vrot.lane.b32.xlu0 %v358, 127
        %v530 = vpop.permute.xlu0 %529
        %531 = vrot.lane.b32.xlu0 %v359, 127
        %v532 = vpop.permute.xlu0 %531
        %533 = vrot.lane.b32.xlu0 %v360, 127
        %v534 = vpop.permute.xlu0 %533
        %535 = vrot.lane.b32.xlu0 %v361, 127
        %v536 = vpop.permute.xlu0 %535
        %537 = vrot.lane.b32.xlu0 %v362, 127
        %v538 = vpop.permute.xlu0 %537
        %539 = vrot.lane.b32.xlu0 %v363, 127
        %v540 = vpop.permute.xlu0 %539
        %541 = vrot.lane.b32.xlu0 %v364, 127
        %v542 = vpop.permute.xlu0 %541
        %543 = vrot.lane.b32.xlu0 %v365, 127
        %v544 = vpop.permute.xlu0 %543
        %545 = vrot.lane.b32.xlu0 %v366, 127
        %v546 = vpop.permute.xlu0 %545
        %547 = vrot.lane.b32.xlu0 %v367, 127
        %v548 = vpop.permute.xlu0 %547
        %549 = vrot.lane.b32.xlu0 %v368, 127
        %v550 = vpop.permute.xlu0 %549
        %551 = vrot.lane.b32.xlu0 %v369, 127
        %v552 = vpop.permute.xlu0 %551
        %553 = vrot.lane.b32.xlu0 %v370, 127
        %v554 = vpop.permute.xlu0 %553
        %555 = vrot.lane.b32.xlu0 %v371, 127
        %v556 = vpop.permute.xlu0 %555
        %557 = vrot.lane.b32.xlu0 %v372, 127
        %v558 = vpop.permute.xlu0 %557
        %559 = vrot.lane.b32.xlu0 %v373, 127
        %v560 = vpop.permute.xlu0 %559
        %561 = vrot.lane.b32.xlu0 %v374, 127
        %v562 = vpop.permute.xlu0 %561
        %563 = vrot.lane.b32.xlu0 %v375, 127
        %v564 = vpop.permute.xlu0 %563
        %565 = vrot.lane.b32.xlu0 %v376, 127
        %v566 = vpop.permute.xlu0 %565
        %567 = vrot.lane.b32.xlu0 %v377, 127
        %v568 = vpop.permute.xlu0 %567
        %569 = vrot.lane.b32.xlu0 %v378, 127
        %v570 = vpop.permute.xlu0 %569
        %v603 = vmul.f32 %v347, %v508
        %v604 = vmul.f32 %v348, %v510
        %v605 = vmul.f32 %v349, %v512
        %v606 = vmul.f32 %v350, %v514
        %v607 = vmul.f32 %v351, %v516
        %v608 = vmul.f32 %v352, %v518
        %v609 = vmul.f32 %v353, %v520
        %v610 = vmul.f32 %v354, %v522
        %v611 = vmul.f32 %v355, %v524
        %v612 = vmul.f32 %v356, %v526
        %v613 = vmul.f32 %v357, %v528
        %v614 = vmul.f32 %v358, %v530
        %v615 = vmul.f32 %v359, %v532
        %v616 = vmul.f32 %v360, %v534
        %v617 = vmul.f32 %v361, %v536
        %v618 = vmul.f32 %v362, %v538
        %v619 = vmul.f32 %v363, %v540
        %v620 = vmul.f32 %v364, %v542
        %v621 = vmul.f32 %v365, %v544
        %v622 = vmul.f32 %v366, %v546
        %v623 = vmul.f32 %v367, %v548
        %v624 = vmul.f32 %v368, %v550
        %v625 = vmul.f32 %v369, %v552
        %v626 = vmul.f32 %v370, %v554
        %v627 = vmul.f32 %v371, %v556
        %v628 = vmul.f32 %v372, %v558
        %v629 = vmul.f32 %v373, %v560
        %v630 = vmul.f32 %v374, %v562
        %v631 = vmul.f32 %v375, %v564
        %v632 = vmul.f32 %v376, %v566
        %v633 = vmul.f32 %v377, %v568
        %v634 = vmul.f32 %v378, %v570
        %v635 = vmul.f32 %v603, 1.0925485
        %v636 = vmul.f32 %v604, 1.0925485
        %v637 = vmul.f32 %v605, 1.0925485
        %v638 = vmul.f32 %v606, 1.0925485
        %v639 = vmul.f32 %v607, 1.0925485
        %v640 = vmul.f32 %v608, 1.0925485
        %v641 = vmul.f32 %v609, 1.0925485
        %v642 = vmul.f32 %v610, 1.0925485
        %v643 = vmul.f32 %v611, 1.0925485
        %v644 = vmul.f32 %v612, 1.0925485
        %v645 = vmul.f32 %v613, 1.0925485
        %v646 = vmul.f32 %v614, 1.0925485
        %v647 = vmul.f32 %v615, 1.0925485
        %v648 = vmul.f32 %v616, 1.0925485
        %v649 = vmul.f32 %v617, 1.0925485
        %v650 = vmul.f32 %v618, 1.0925485
        %v651 = vmul.f32 %v619, 1.0925485
        %v652 = vmul.f32 %v620, 1.0925485
        %v653 = vmul.f32 %v621, 1.0925485
        %v654 = vmul.f32 %v622, 1.0925485
        %v655 = vmul.f32 %v623, 1.0925485
        %v656 = vmul.f32 %v624, 1.0925485
        %v657 = vmul.f32 %v625, 1.0925485
        %v658 = vmul.f32 %v626, 1.0925485
        %v659 = vmul.f32 %v627, 1.0925485
        %v660 = vmul.f32 %v628, 1.0925485
        %v661 = vmul.f32 %v629, 1.0925485
        %v662 = vmul.f32 %v630, 1.0925485
        %v663 = vmul.f32 %v631, 1.0925485
        %v664 = vmul.f32 %v632, 1.0925485
        %v665 = vmul.f32 %v633, 1.0925485
        %v666 = vmul.f32 %v634, 1.0925485
        %v667 = vmul.f32 %v603, -1.0925485
        %v668 = vmul.f32 %v604, -1.0925485
        %v669 = vmul.f32 %v605, -1.0925485
        %v670 = vmul.f32 %v606, -1.0925485
        %v671 = vmul.f32 %v607, -1.0925485
        %v672 = vmul.f32 %v608, -1.0925485
        %v673 = vmul.f32 %v609, -1.0925485
        %v674 = vmul.f32 %v610, -1.0925485
        %v675 = vmul.f32 %v611, -1.0925485
        %v676 = vmul.f32 %v612, -1.0925485
        %v677 = vmul.f32 %v613, -1.0925485
        %v678 = vmul.f32 %v614, -1.0925485
        %v679 = vmul.f32 %v615, -1.0925485
        %v680 = vmul.f32 %v616, -1.0925485
        %v681 = vmul.f32 %v617, -1.0925485
        %v682 = vmul.f32 %v618, -1.0925485
        %v683 = vmul.f32 %v619, -1.0925485
        %v684 = vmul.f32 %v620, -1.0925485
        %v685 = vmul.f32 %v621, -1.0925485
        %v686 = vmul.f32 %v622, -1.0925485
        %v687 = vmul.f32 %v623, -1.0925485
        %v688 = vmul.f32 %v624, -1.0925485
        %v689 = vmul.f32 %v625, -1.0925485
        %v690 = vmul.f32 %v626, -1.0925485
        %v691 = vmul.f32 %v627, -1.0925485
        %v692 = vmul.f32 %v628, -1.0925485
        %v693 = vmul.f32 %v629, -1.0925485
        %v694 = vmul.f32 %v630, -1.0925485
        %v695 = vmul.f32 %v631, -1.0925485
        %v696 = vmul.f32 %v632, -1.0925485
        %v697 = vmul.f32 %v633, -1.0925485
        %v698 = vmul.f32 %v634, -1.0925485
        %v699 = vmul.f32 %v379, 2.0
        %v700 = vmul.f32 %v380, 2.0
        %v701 = vmul.f32 %v381, 2.0
        %v702 = vmul.f32 %v382, 2.0
        %v703 = vmul.f32 %v383, 2.0
        %v704 = vmul.f32 %v384, 2.0
        %v705 = vmul.f32 %v385, 2.0
        %v706 = vmul.f32 %v386, 2.0
        %v707 = vmul.f32 %v387, 2.0
        %v708 = vmul.f32 %v388, 2.0
        %v709 = vmul.f32 %v389, 2.0
        %v710 = vmul.f32 %v390, 2.0
        %v711 = vmul.f32 %v391, 2.0
        %v712 = vmul.f32 %v392, 2.0
        %v713 = vmul.f32 %v393, 2.0
        %v714 = vmul.f32 %v394, 2.0
        %v715 = vmul.f32 %v395, 2.0
        %v716 = vmul.f32 %v396, 2.0
        %v717 = vmul.f32 %v397, 2.0
        %v718 = vmul.f32 %v398, 2.0
        %v719 = vmul.f32 %v399, 2.0
        %v720 = vmul.f32 %v400, 2.0
        %v721 = vmul.f32 %v401, 2.0
        %v722 = vmul.f32 %v402, 2.0
        %v723 = vmul.f32 %v403, 2.0
        %v724 = vmul.f32 %v404, 2.0
        %v725 = vmul.f32 %v405, 2.0
        %v726 = vmul.f32 %v406, 2.0
        %v727 = vmul.f32 %v407, 2.0
        %v728 = vmul.f32 %v408, 2.0
        %v729 = vmul.f32 %v409, 2.0
        %v730 = vmul.f32 %v410, 2.0
        %763 = vrot.lane.b32.xlu0 %v379, 2
        %v764 = vpop.permute.xlu0 %763
        %765 = vrot.lane.b32.xlu0 %v380, 2
        %v766 = vpop.permute.xlu0 %765
        %767 = vrot.lane.b32.xlu0 %v381, 2
        %v768 = vpop.permute.xlu0 %767
        %769 = vrot.lane.b32.xlu0 %v382, 2
        %v770 = vpop.permute.xlu0 %769
        %771 = vrot.lane.b32.xlu0 %v383, 2
        %v772 = vpop.permute.xlu0 %771
        %773 = vrot.lane.b32.xlu0 %v384, 2
        %v774 = vpop.permute.xlu0 %773
        %775 = vrot.lane.b32.xlu0 %v385, 2
        %v776 = vpop.permute.xlu0 %775
        %777 = vrot.lane.b32.xlu0 %v386, 2
        %v778 = vpop.permute.xlu0 %777
        %779 = vrot.lane.b32.xlu0 %v387, 2
        %v780 = vpop.permute.xlu0 %779
        %781 = vrot.lane.b32.xlu0 %v388, 2
        %v782 = vpop.permute.xlu0 %781
        %783 = vrot.lane.b32.xlu0 %v389, 2
        %v784 = vpop.permute.xlu0 %783
        %785 = vrot.lane.b32.xlu0 %v390, 2
        %v786 = vpop.permute.xlu0 %785
        %787 = vrot.lane.b32.xlu0 %v391, 2
        %v788 = vpop.permute.xlu0 %787
        %789 = vrot.lane.b32.xlu0 %v392, 2
        %v790 = vpop.permute.xlu0 %789
        %791 = vrot.lane.b32.xlu0 %v393, 2
        %v792 = vpop.permute.xlu0 %791
        %793 = vrot.lane.b32.xlu0 %v394, 2
        %v794 = vpop.permute.xlu0 %793
        %795 = vrot.lane.b32.xlu0 %v395, 2
        %v796 = vpop.permute.xlu0 %795
        %797 = vrot.lane.b32.xlu0 %v396, 2
        %v798 = vpop.permute.xlu0 %797
        %799 = vrot.lane.b32.xlu0 %v397, 2
        %v800 = vpop.permute.xlu0 %799
        %801 = vrot.lane.b32.xlu0 %v398, 2
        %v802 = vpop.permute.xlu0 %801
        %803 = vrot.lane.b32.xlu0 %v399, 2
        %v804 = vpop.permute.xlu0 %803
        %805 = vrot.lane.b32.xlu0 %v400, 2
        %v806 = vpop.permute.xlu0 %805
        %807 = vrot.lane.b32.xlu0 %v401, 2
        %v808 = vpop.permute.xlu0 %807
        %809 = vrot.lane.b32.xlu0 %v402, 2
        %v810 = vpop.permute.xlu0 %809
        %811 = vrot.lane.b32.xlu0 %v403, 2
        %v812 = vpop.permute.xlu0 %811
        %813 = vrot.lane.b32.xlu0 %v404, 2
        %v814 = vpop.permute.xlu0 %813
        %815 = vrot.lane.b32.xlu0 %v405, 2
        %v816 = vpop.permute.xlu0 %815
        %817 = vrot.lane.b32.xlu0 %v406, 2
        %v818 = vpop.permute.xlu0 %817
        %819 = vrot.lane.b32.xlu0 %v407, 2
        %v820 = vpop.permute.xlu0 %819
        %821 = vrot.lane.b32.xlu0 %v408, 2
        %v822 = vpop.permute.xlu0 %821
        %823 = vrot.lane.b32.xlu0 %v409, 2
        %v824 = vpop.permute.xlu0 %823
        %825 = vrot.lane.b32.xlu0 %v410, 2
        %v826 = vpop.permute.xlu0 %825
        %v859 = vsub.f32 %v699, %v764
        %v860 = vsub.f32 %v700, %v766
        %v861 = vsub.f32 %v701, %v768
        %v862 = vsub.f32 %v702, %v770
        %v863 = vsub.f32 %v703, %v772
        %v864 = vsub.f32 %v704, %v774
        %v865 = vsub.f32 %v705, %v776
        %v866 = vsub.f32 %v706, %v778
        %v867 = vsub.f32 %v707, %v780
        %v868 = vsub.f32 %v708, %v782
        %v869 = vsub.f32 %v709, %v784
        %v870 = vsub.f32 %v710, %v786
        %v871 = vsub.f32 %v711, %v788
        %v872 = vsub.f32 %v712, %v790
        %v873 = vsub.f32 %v713, %v792
        %v874 = vsub.f32 %v714, %v794
        %v875 = vsub.f32 %v715, %v796
        %v876 = vsub.f32 %v716, %v798
        %v877 = vsub.f32 %v717, %v800
        %v878 = vsub.f32 %v718, %v802
        %v879 = vsub.f32 %v719, %v804
        %v880 = vsub.f32 %v720, %v806
        %v881 = vsub.f32 %v721, %v808
        %v882 = vsub.f32 %v722, %v810
        %v883 = vsub.f32 %v723, %v812
        %v884 = vsub.f32 %v724, %v814
        %v885 = vsub.f32 %v725, %v816
        %v886 = vsub.f32 %v726, %v818
        %v887 = vsub.f32 %v727, %v820
        %v888 = vsub.f32 %v728, %v822
        %v889 = vsub.f32 %v729, %v824
        %v890 = vsub.f32 %v730, %v826
        %891 = vrot.lane.b32.xlu0 %v379, 1
        %v892 = vpop.permute.xlu0 %891
        %893 = vrot.lane.b32.xlu0 %v380, 1
        %v894 = vpop.permute.xlu0 %893
        %895 = vrot.lane.b32.xlu0 %v381, 1
        %v896 = vpop.permute.xlu0 %895
        %897 = vrot.lane.b32.xlu0 %v382, 1
        %v898 = vpop.permute.xlu0 %897
        %899 = vrot.lane.b32.xlu0 %v383, 1
        %v900 = vpop.permute.xlu0 %899
        %901 = vrot.lane.b32.xlu0 %v384, 1
        %v902 = vpop.permute.xlu0 %901
        %903 = vrot.lane.b32.xlu0 %v385, 1
        %v904 = vpop.permute.xlu0 %903
        %905 = vrot.lane.b32.xlu0 %v386, 1
        %v906 = vpop.permute.xlu0 %905
        %907 = vrot.lane.b32.xlu0 %v387, 1
        %v908 = vpop.permute.xlu0 %907
        %909 = vrot.lane.b32.xlu0 %v388, 1
        %v910 = vpop.permute.xlu0 %909
        %911 = vrot.lane.b32.xlu0 %v389, 1
        %v912 = vpop.permute.xlu0 %911
        %913 = vrot.lane.b32.xlu0 %v390, 1
        %v914 = vpop.permute.xlu0 %913
        %915 = vrot.lane.b32.xlu0 %v391, 1
        %v916 = vpop.permute.xlu0 %915
        %917 = vrot.lane.b32.xlu0 %v392, 1
        %v918 = vpop.permute.xlu0 %917
        %919 = vrot.lane.b32.xlu0 %v393, 1
        %v920 = vpop.permute.xlu0 %919
        %921 = vrot.lane.b32.xlu0 %v394, 1
        %v922 = vpop.permute.xlu0 %921
        %923 = vrot.lane.b32.xlu0 %v395, 1
        %v924 = vpop.permute.xlu0 %923
        %925 = vrot.lane.b32.xlu0 %v396, 1
        %v926 = vpop.permute.xlu0 %925
        %927 = vrot.lane.b32.xlu0 %v397, 1
        %v928 = vpop.permute.xlu0 %927
        %929 = vrot.lane.b32.xlu0 %v398, 1
        %v930 = vpop.permute.xlu0 %929
        %931 = vrot.lane.b32.xlu0 %v399, 1
        %v932 = vpop.permute.xlu0 %931
        %933 = vrot.lane.b32.xlu0 %v400, 1
        %v934 = vpop.permute.xlu0 %933
        %935 = vrot.lane.b32.xlu0 %v401, 1
        %v936 = vpop.permute.xlu0 %935
        %937 = vrot.lane.b32.xlu0 %v402, 1
        %v938 = vpop.permute.xlu0 %937
        %939 = vrot.lane.b32.xlu0 %v403, 1
        %v940 = vpop.permute.xlu0 %939
        %941 = vrot.lane.b32.xlu0 %v404, 1
        %v942 = vpop.permute.xlu0 %941
        %943 = vrot.lane.b32.xlu0 %v405, 1
        %v944 = vpop.permute.xlu0 %943
        %945 = vrot.lane.b32.xlu0 %v406, 1
        %v946 = vpop.permute.xlu0 %945
        %947 = vrot.lane.b32.xlu0 %v407, 1
        %v948 = vpop.permute.xlu0 %947
        %949 = vrot.lane.b32.xlu0 %v408, 1
        %v950 = vpop.permute.xlu0 %949
        %951 = vrot.lane.b32.xlu0 %v409, 1
        %v952 = vpop.permute.xlu0 %951
        %953 = vrot.lane.b32.xlu0 %v410, 1
        %v954 = vpop.permute.xlu0 %953
        %v987 = vsub.f32 %v859, %v892
        %v988 = vsub.f32 %v860, %v894
        %v989 = vsub.f32 %v861, %v896
        %v990 = vsub.f32 %v862, %v898
        %v991 = vsub.f32 %v863, %v900
        %v992 = vsub.f32 %v864, %v902
        %v993 = vsub.f32 %v865, %v904
        %v994 = vsub.f32 %v866, %v906
        %v995 = vsub.f32 %v867, %v908
        %v996 = vsub.f32 %v868, %v910
        %v997 = vsub.f32 %v869, %v912
        %v998 = vsub.f32 %v870, %v914
        %v999 = vsub.f32 %v871, %v916
        %v1000 = vsub.f32 %v872, %v918
        %v1001 = vsub.f32 %v873, %v920
        %v1002 = vsub.f32 %v874, %v922
        %v1003 = vsub.f32 %v875, %v924
        %v1004 = vsub.f32 %v876, %v926
        %v1005 = vsub.f32 %v877, %v928
        %v1006 = vsub.f32 %v878, %v930
        %v1007 = vsub.f32 %v879, %v932
        %v1008 = vsub.f32 %v880, %v934
        %v1009 = vsub.f32 %v881, %v936
        %v1010 = vsub.f32 %v882, %v938
        %v1011 = vsub.f32 %v883, %v940
        %v1012 = vsub.f32 %v884, %v942
        %v1013 = vsub.f32 %v885, %v944
        %v1014 = vsub.f32 %v886, %v946
        %v1015 = vsub.f32 %v887, %v948
        %v1016 = vsub.f32 %v888, %v950
        %v1017 = vsub.f32 %v889, %v952
        %v1018 = vsub.f32 %v890, %v954
        %v1019 = vmul.f32 %v987, 0.31539157
        %v1020 = vmul.f32 %v988, 0.31539157
        %v1021 = vmul.f32 %v989, 0.31539157
        %v1022 = vmul.f32 %v990, 0.31539157
        %v1023 = vmul.f32 %v991, 0.31539157
        %v1024 = vmul.f32 %v992, 0.31539157
        %v1025 = vmul.f32 %v993, 0.31539157
        %v1026 = vmul.f32 %v994, 0.31539157
        %v1027 = vmul.f32 %v995, 0.31539157
        %v1028 = vmul.f32 %v996, 0.31539157
        %v1029 = vmul.f32 %v997, 0.31539157
        %v1030 = vmul.f32 %v998, 0.31539157
        %v1031 = vmul.f32 %v999, 0.31539157
        %v1032 = vmul.f32 %v1000, 0.31539157
        %v1033 = vmul.f32 %v1001, 0.31539157
        %v1034 = vmul.f32 %v1002, 0.31539157
        %v1035 = vmul.f32 %v1003, 0.31539157
        %v1036 = vmul.f32 %v1004, 0.31539157
        %v1037 = vmul.f32 %v1005, 0.31539157
        %v1038 = vmul.f32 %v1006, 0.31539157
        %v1039 = vmul.f32 %v1007, 0.31539157
        %v1040 = vmul.f32 %v1008, 0.31539157
        %v1041 = vmul.f32 %v1009, 0.31539157
        %v1042 = vmul.f32 %v1010, 0.31539157
        %v1043 = vmul.f32 %v1011, 0.31539157
        %v1044 = vmul.f32 %v1012, 0.31539157
        %v1045 = vmul.f32 %v1013, 0.31539157
        %v1046 = vmul.f32 %v1014, 0.31539157
        %v1047 = vmul.f32 %v1015, 0.31539157
        %v1048 = vmul.f32 %v1016, 0.31539157
        %v1049 = vmul.f32 %v1017, 0.31539157
        %v1050 = vmul.f32 %v1018, 0.31539157
        %1051 = vrot.lane.b32.xlu0 %v347, 126
        %v1052 = vpop.permute.xlu0 %1051
        %1053 = vrot.lane.b32.xlu0 %v348, 126
        %v1054 = vpop.permute.xlu0 %1053
        %1055 = vrot.lane.b32.xlu0 %v349, 126
        %v1056 = vpop.permute.xlu0 %1055
        %1057 = vrot.lane.b32.xlu0 %v350, 126
        %v1058 = vpop.permute.xlu0 %1057
        %1059 = vrot.lane.b32.xlu0 %v351, 126
        %v1060 = vpop.permute.xlu0 %1059
        %1061 = vrot.lane.b32.xlu0 %v352, 126
        %v1062 = vpop.permute.xlu0 %1061
        %1063 = vrot.lane.b32.xlu0 %v353, 126
        %v1064 = vpop.permute.xlu0 %1063
        %1065 = vrot.lane.b32.xlu0 %v354, 126
        %v1066 = vpop.permute.xlu0 %1065
        %1067 = vrot.lane.b32.xlu0 %v355, 126
        %v1068 = vpop.permute.xlu0 %1067
        %1069 = vrot.lane.b32.xlu0 %v356, 126
        %v1070 = vpop.permute.xlu0 %1069
        %1071 = vrot.lane.b32.xlu0 %v357, 126
        %v1072 = vpop.permute.xlu0 %1071
        %1073 = vrot.lane.b32.xlu0 %v358, 126
        %v1074 = vpop.permute.xlu0 %1073
        %1075 = vrot.lane.b32.xlu0 %v359, 126
        %v1076 = vpop.permute.xlu0 %1075
        %1077 = vrot.lane.b32.xlu0 %v360, 126
        %v1078 = vpop.permute.xlu0 %1077
        %1079 = vrot.lane.b32.xlu0 %v361, 126
        %v1080 = vpop.permute.xlu0 %1079
        %1081 = vrot.lane.b32.xlu0 %v362, 126
        %v1082 = vpop.permute.xlu0 %1081
        %1083 = vrot.lane.b32.xlu0 %v363, 126
        %v1084 = vpop.permute.xlu0 %1083
        %1085 = vrot.lane.b32.xlu0 %v364, 126
        %v1086 = vpop.permute.xlu0 %1085
        %1087 = vrot.lane.b32.xlu0 %v365, 126
        %v1088 = vpop.permute.xlu0 %1087
        %1089 = vrot.lane.b32.xlu0 %v366, 126
        %v1090 = vpop.permute.xlu0 %1089
        %1091 = vrot.lane.b32.xlu0 %v367, 126
        %v1092 = vpop.permute.xlu0 %1091
        %1093 = vrot.lane.b32.xlu0 %v368, 126
        %v1094 = vpop.permute.xlu0 %1093
        %1095 = vrot.lane.b32.xlu0 %v369, 126
        %v1096 = vpop.permute.xlu0 %1095
        %1097 = vrot.lane.b32.xlu0 %v370, 126
        %v1098 = vpop.permute.xlu0 %1097
        %1099 = vrot.lane.b32.xlu0 %v371, 126
        %v1100 = vpop.permute.xlu0 %1099
        %1101 = vrot.lane.b32.xlu0 %v372, 126
        %v1102 = vpop.permute.xlu0 %1101
        %1103 = vrot.lane.b32.xlu0 %v373, 126
        %v1104 = vpop.permute.xlu0 %1103
        %1105 = vrot.lane.b32.xlu0 %v374, 126
        %v1106 = vpop.permute.xlu0 %1105
        %1107 = vrot.lane.b32.xlu0 %v375, 126
        %v1108 = vpop.permute.xlu0 %1107
        %1109 = vrot.lane.b32.xlu0 %v376, 126
        %v1110 = vpop.permute.xlu0 %1109
        %1111 = vrot.lane.b32.xlu0 %v377, 126
        %v1112 = vpop.permute.xlu0 %1111
        %1113 = vrot.lane.b32.xlu0 %v378, 126
        %v1114 = vpop.permute.xlu0 %1113
        %v1147 = vmul.f32 %v347, %v1052
        %v1148 = vmul.f32 %v348, %v1054
        %v1149 = vmul.f32 %v349, %v1056
        %v1150 = vmul.f32 %v350, %v1058
        %v1151 = vmul.f32 %v351, %v1060
        %v1152 = vmul.f32 %v352, %v1062
        %v1153 = vmul.f32 %v353, %v1064
        %v1154 = vmul.f32 %v354, %v1066
        %v1155 = vmul.f32 %v355, %v1068
        %v1156 = vmul.f32 %v356, %v1070
        %v1157 = vmul.f32 %v357, %v1072
        %v1158 = vmul.f32 %v358, %v1074
        %v1159 = vmul.f32 %v359, %v1076
        %v1160 = vmul.f32 %v360, %v1078
        %v1161 = vmul.f32 %v361, %v1080
        %v1162 = vmul.f32 %v362, %v1082
        %v1163 = vmul.f32 %v363, %v1084
        %v1164 = vmul.f32 %v364, %v1086
        %v1165 = vmul.f32 %v365, %v1088
        %v1166 = vmul.f32 %v366, %v1090
        %v1167 = vmul.f32 %v367, %v1092
        %v1168 = vmul.f32 %v368, %v1094
        %v1169 = vmul.f32 %v369, %v1096
        %v1170 = vmul.f32 %v370, %v1098
        %v1171 = vmul.f32 %v371, %v1100
        %v1172 = vmul.f32 %v372, %v1102
        %v1173 = vmul.f32 %v373, %v1104
        %v1174 = vmul.f32 %v374, %v1106
        %v1175 = vmul.f32 %v375, %v1108
        %v1176 = vmul.f32 %v376, %v1110
        %v1177 = vmul.f32 %v377, %v1112
        %v1178 = vmul.f32 %v378, %v1114
        %v1179 = vmul.f32 %v1147, -1.0925485
        %v1180 = vmul.f32 %v1148, -1.0925485
        %v1181 = vmul.f32 %v1149, -1.0925485
        %v1182 = vmul.f32 %v1150, -1.0925485
        %v1183 = vmul.f32 %v1151, -1.0925485
        %v1184 = vmul.f32 %v1152, -1.0925485
        %v1185 = vmul.f32 %v1153, -1.0925485
        %v1186 = vmul.f32 %v1154, -1.0925485
        %v1187 = vmul.f32 %v1155, -1.0925485
        %v1188 = vmul.f32 %v1156, -1.0925485
        %v1189 = vmul.f32 %v1157, -1.0925485
        %v1190 = vmul.f32 %v1158, -1.0925485
        %v1191 = vmul.f32 %v1159, -1.0925485
        %v1192 = vmul.f32 %v1160, -1.0925485
        %v1193 = vmul.f32 %v1161, -1.0925485
        %v1194 = vmul.f32 %v1162, -1.0925485
        %v1195 = vmul.f32 %v1163, -1.0925485
        %v1196 = vmul.f32 %v1164, -1.0925485
        %v1197 = vmul.f32 %v1165, -1.0925485
        %v1198 = vmul.f32 %v1166, -1.0925485
        %v1199 = vmul.f32 %v1167, -1.0925485
        %v1200 = vmul.f32 %v1168, -1.0925485
        %v1201 = vmul.f32 %v1169, -1.0925485
        %v1202 = vmul.f32 %v1170, -1.0925485
        %v1203 = vmul.f32 %v1171, -1.0925485
        %v1204 = vmul.f32 %v1172, -1.0925485
        %v1205 = vmul.f32 %v1173, -1.0925485
        %v1206 = vmul.f32 %v1174, -1.0925485
        %v1207 = vmul.f32 %v1175, -1.0925485
        %v1208 = vmul.f32 %v1176, -1.0925485
        %v1209 = vmul.f32 %v1177, -1.0925485
        %v1210 = vmul.f32 %v1178, -1.0925485
        %1211 = vrot.lane.b32.xlu0 %v379, 127
        %v1212 = vpop.permute.xlu0 %1211
        %1213 = vrot.lane.b32.xlu0 %v380, 127
        %v1214 = vpop.permute.xlu0 %1213
        %1215 = vrot.lane.b32.xlu0 %v381, 127
        %v1216 = vpop.permute.xlu0 %1215
        %1217 = vrot.lane.b32.xlu0 %v382, 127
        %v1218 = vpop.permute.xlu0 %1217
        %1219 = vrot.lane.b32.xlu0 %v383, 127
        %v1220 = vpop.permute.xlu0 %1219
        %1221 = vrot.lane.b32.xlu0 %v384, 127
        %v1222 = vpop.permute.xlu0 %1221
        %1223 = vrot.lane.b32.xlu0 %v385, 127
        %v1224 = vpop.permute.xlu0 %1223
        %1225 = vrot.lane.b32.xlu0 %v386, 127
        %v1226 = vpop.permute.xlu0 %1225
        %1227 = vrot.lane.b32.xlu0 %v387, 127
        %v1228 = vpop.permute.xlu0 %1227
        %1229 = vrot.lane.b32.xlu0 %v388, 127
        %v1230 = vpop.permute.xlu0 %1229
        %1231 = vrot.lane.b32.xlu0 %v389, 127
        %v1232 = vpop.permute.xlu0 %1231
        %1233 = vrot.lane.b32.xlu0 %v390, 127
        %v1234 = vpop.permute.xlu0 %1233
        %1235 = vrot.lane.b32.xlu0 %v391, 127
        %v1236 = vpop.permute.xlu0 %1235
        %1237 = vrot.lane.b32.xlu0 %v392, 127
        %v1238 = vpop.permute.xlu0 %1237
        %1239 = vrot.lane.b32.xlu0 %v393, 127
        %v1240 = vpop.permute.xlu0 %1239
        %1241 = vrot.lane.b32.xlu0 %v394, 127
        %v1242 = vpop.permute.xlu0 %1241
        %1243 = vrot.lane.b32.xlu0 %v395, 127
        %v1244 = vpop.permute.xlu0 %1243
        %1245 = vrot.lane.b32.xlu0 %v396, 127
        %v1246 = vpop.permute.xlu0 %1245
        %1247 = vrot.lane.b32.xlu0 %v397, 127
        %v1248 = vpop.permute.xlu0 %1247
        %1249 = vrot.lane.b32.xlu0 %v398, 127
        %v1250 = vpop.permute.xlu0 %1249
        %1251 = vrot.lane.b32.xlu0 %v399, 127
        %v1252 = vpop.permute.xlu0 %1251
        %1253 = vrot.lane.b32.xlu0 %v400, 127
        %v1254 = vpop.permute.xlu0 %1253
        %1255 = vrot.lane.b32.xlu0 %v401, 127
        %v1256 = vpop.permute.xlu0 %1255
        %1257 = vrot.lane.b32.xlu0 %v402, 127
        %v1258 = vpop.permute.xlu0 %1257
        %1259 = vrot.lane.b32.xlu0 %v403, 127
        %v1260 = vpop.permute.xlu0 %1259
        %1261 = vrot.lane.b32.xlu0 %v404, 127
        %v1262 = vpop.permute.xlu0 %1261
        %1263 = vrot.lane.b32.xlu0 %v405, 127
        %v1264 = vpop.permute.xlu0 %1263
        %1265 = vrot.lane.b32.xlu0 %v406, 127
        %v1266 = vpop.permute.xlu0 %1265
        %1267 = vrot.lane.b32.xlu0 %v407, 127
        %v1268 = vpop.permute.xlu0 %1267
        %1269 = vrot.lane.b32.xlu0 %v408, 127
        %v1270 = vpop.permute.xlu0 %1269
        %1271 = vrot.lane.b32.xlu0 %v409, 127
        %v1272 = vpop.permute.xlu0 %1271
        %1273 = vrot.lane.b32.xlu0 %v410, 127
        %v1274 = vpop.permute.xlu0 %1273
        %v1307 = vsub.f32 %v379, %v1212
        %v1308 = vsub.f32 %v380, %v1214
        %v1309 = vsub.f32 %v381, %v1216
        %v1310 = vsub.f32 %v382, %v1218
        %v1311 = vsub.f32 %v383, %v1220
        %v1312 = vsub.f32 %v384, %v1222
        %v1313 = vsub.f32 %v385, %v1224
        %v1314 = vsub.f32 %v386, %v1226
        %v1315 = vsub.f32 %v387, %v1228
        %v1316 = vsub.f32 %v388, %v1230
        %v1317 = vsub.f32 %v389, %v1232
        %v1318 = vsub.f32 %v390, %v1234
        %v1319 = vsub.f32 %v391, %v1236
        %v1320 = vsub.f32 %v392, %v1238
        %v1321 = vsub.f32 %v393, %v1240
        %v1322 = vsub.f32 %v394, %v1242
        %v1323 = vsub.f32 %v395, %v1244
        %v1324 = vsub.f32 %v396, %v1246
        %v1325 = vsub.f32 %v397, %v1248
        %v1326 = vsub.f32 %v398, %v1250
        %v1327 = vsub.f32 %v399, %v1252
        %v1328 = vsub.f32 %v400, %v1254
        %v1329 = vsub.f32 %v401, %v1256
        %v1330 = vsub.f32 %v402, %v1258
        %v1331 = vsub.f32 %v403, %v1260
        %v1332 = vsub.f32 %v404, %v1262
        %v1333 = vsub.f32 %v405, %v1264
        %v1334 = vsub.f32 %v406, %v1266
        %v1335 = vsub.f32 %v407, %v1268
        %v1336 = vsub.f32 %v408, %v1270
        %v1337 = vsub.f32 %v409, %v1272
        %v1338 = vsub.f32 %v410, %v1274
        %v1339 = vmul.f32 %v1307, 0.54627424
        %v1340 = vmul.f32 %v1308, 0.54627424
        %v1341 = vmul.f32 %v1309, 0.54627424
        %v1342 = vmul.f32 %v1310, 0.54627424
        %v1343 = vmul.f32 %v1311, 0.54627424
        %v1344 = vmul.f32 %v1312, 0.54627424
        %v1345 = vmul.f32 %v1313, 0.54627424
        %v1346 = vmul.f32 %v1314, 0.54627424
        %v1347 = vmul.f32 %v1315, 0.54627424
        %v1348 = vmul.f32 %v1316, 0.54627424
        %v1349 = vmul.f32 %v1317, 0.54627424
        %v1350 = vmul.f32 %v1318, 0.54627424
        %v1351 = vmul.f32 %v1319, 0.54627424
        %v1352 = vmul.f32 %v1320, 0.54627424
        %v1353 = vmul.f32 %v1321, 0.54627424
        %v1354 = vmul.f32 %v1322, 0.54627424
        %v1355 = vmul.f32 %v1323, 0.54627424
        %v1356 = vmul.f32 %v1324, 0.54627424
        %v1357 = vmul.f32 %v1325, 0.54627424
        %v1358 = vmul.f32 %v1326, 0.54627424
        %v1359 = vmul.f32 %v1327, 0.54627424
        %v1360 = vmul.f32 %v1328, 0.54627424
        %v1361 = vmul.f32 %v1329, 0.54627424
        %v1362 = vmul.f32 %v1330, 0.54627424
        %v1363 = vmul.f32 %v1331, 0.54627424
        %v1364 = vmul.f32 %v1332, 0.54627424
        %v1365 = vmul.f32 %v1333, 0.54627424
        %v1366 = vmul.f32 %v1334, 0.54627424
        %v1367 = vmul.f32 %v1335, 0.54627424
        %v1368 = vmul.f32 %v1336, 0.54627424
        %v1369 = vmul.f32 %v1337, 0.54627424
        %v1370 = vmul.f32 %v1338, 0.54627424
        %1403 = vrot.lane.b32.xlu0 %v411, 15
        %v1404 = vpop.permute.xlu0 %1403
        %1405 = vrot.lane.b32.xlu0 %v412, 15
        %v1406 = vpop.permute.xlu0 %1405
        %1407 = vrot.lane.b32.xlu0 %v413, 15
        %v1408 = vpop.permute.xlu0 %1407
        %1409 = vrot.lane.b32.xlu0 %v414, 15
        %v1410 = vpop.permute.xlu0 %1409
        %1411 = vrot.lane.b32.xlu0 %v415, 15
        %v1412 = vpop.permute.xlu0 %1411
        %1413 = vrot.lane.b32.xlu0 %v416, 15
        %v1414 = vpop.permute.xlu0 %1413
        %1415 = vrot.lane.b32.xlu0 %v417, 15
        %v1416 = vpop.permute.xlu0 %1415
        %1417 = vrot.lane.b32.xlu0 %v418, 15
        %v1418 = vpop.permute.xlu0 %1417
        %1419 = vrot.lane.b32.xlu0 %v419, 15
        %v1420 = vpop.permute.xlu0 %1419
        %1421 = vrot.lane.b32.xlu0 %v420, 15
        %v1422 = vpop.permute.xlu0 %1421
        %1423 = vrot.lane.b32.xlu0 %v421, 15
        %v1424 = vpop.permute.xlu0 %1423
        %1425 = vrot.lane.b32.xlu0 %v422, 15
        %v1426 = vpop.permute.xlu0 %1425
        %1427 = vrot.lane.b32.xlu0 %v423, 15
        %v1428 = vpop.permute.xlu0 %1427
        %1429 = vrot.lane.b32.xlu0 %v424, 15
        %v1430 = vpop.permute.xlu0 %1429
        %1431 = vrot.lane.b32.xlu0 %v425, 15
        %v1432 = vpop.permute.xlu0 %1431
        %1433 = vrot.lane.b32.xlu0 %v426, 15
        %v1434 = vpop.permute.xlu0 %1433
        %1435 = vrot.lane.b32.xlu0 %v427, 15
        %v1436 = vpop.permute.xlu0 %1435
        %1437 = vrot.lane.b32.xlu0 %v428, 15
        %v1438 = vpop.permute.xlu0 %1437
        %1439 = vrot.lane.b32.xlu0 %v429, 15
        %v1440 = vpop.permute.xlu0 %1439
        %1441 = vrot.lane.b32.xlu0 %v430, 15
        %v1442 = vpop.permute.xlu0 %1441
        %1443 = vrot.lane.b32.xlu0 %v431, 15
        %v1444 = vpop.permute.xlu0 %1443
        %1445 = vrot.lane.b32.xlu0 %v432, 15
        %v1446 = vpop.permute.xlu0 %1445
        %1447 = vrot.lane.b32.xlu0 %v433, 15
        %v1448 = vpop.permute.xlu0 %1447
        %1449 = vrot.lane.b32.xlu0 %v434, 15
        %v1450 = vpop.permute.xlu0 %1449
        %1451 = vrot.lane.b32.xlu0 %v435, 15
        %v1452 = vpop.permute.xlu0 %1451
        %1453 = vrot.lane.b32.xlu0 %v436, 15
        %v1454 = vpop.permute.xlu0 %1453
        %1455 = vrot.lane.b32.xlu0 %v437, 15
        %v1456 = vpop.permute.xlu0 %1455
        %1457 = vrot.lane.b32.xlu0 %v438, 15
        %v1458 = vpop.permute.xlu0 %1457
        %1459 = vrot.lane.b32.xlu0 %v439, 15
        %v1460 = vpop.permute.xlu0 %1459
        %1461 = vrot.lane.b32.xlu0 %v440, 15
        %v1462 = vpop.permute.xlu0 %1461
        %1463 = vrot.lane.b32.xlu0 %v441, 15
        %v1464 = vpop.permute.xlu0 %1463
        %1465 = vrot.lane.b32.xlu0 %v442, 15
        %v1466 = vpop.permute.xlu0 %1465
        %1531 = vrot.lane.b32.xlu0 %v443, 15
        %v1532 = vpop.permute.xlu0 %1531
        %1533 = vrot.lane.b32.xlu0 %v444, 15
        %v1534 = vpop.permute.xlu0 %1533
        %1535 = vrot.lane.b32.xlu0 %v445, 15
        %v1536 = vpop.permute.xlu0 %1535
        %1537 = vrot.lane.b32.xlu0 %v446, 15
        %v1538 = vpop.permute.xlu0 %1537
        %1539 = vrot.lane.b32.xlu0 %v447, 15
        %v1540 = vpop.permute.xlu0 %1539
        %1541 = vrot.lane.b32.xlu0 %v448, 15
        %v1542 = vpop.permute.xlu0 %1541
        %1543 = vrot.lane.b32.xlu0 %v449, 15
        %v1544 = vpop.permute.xlu0 %1543
        %1545 = vrot.lane.b32.xlu0 %v450, 15
        %v1546 = vpop.permute.xlu0 %1545
        %1547 = vrot.lane.b32.xlu0 %v451, 15
        %v1548 = vpop.permute.xlu0 %1547
        %1549 = vrot.lane.b32.xlu0 %v452, 15
        %v1550 = vpop.permute.xlu0 %1549
        %1551 = vrot.lane.b32.xlu0 %v453, 15
        %v1552 = vpop.permute.xlu0 %1551
        %1553 = vrot.lane.b32.xlu0 %v454, 15
        %v1554 = vpop.permute.xlu0 %1553
        %1555 = vrot.lane.b32.xlu0 %v455, 15
        %v1556 = vpop.permute.xlu0 %1555
        %1557 = vrot.lane.b32.xlu0 %v456, 15
        %v1558 = vpop.permute.xlu0 %1557
        %1559 = vrot.lane.b32.xlu0 %v457, 15
        %v1560 = vpop.permute.xlu0 %1559
        %1561 = vrot.lane.b32.xlu0 %v458, 15
        %v1562 = vpop.permute.xlu0 %1561
        %1563 = vrot.lane.b32.xlu0 %v459, 15
        %v1564 = vpop.permute.xlu0 %1563
        %1565 = vrot.lane.b32.xlu0 %v460, 15
        %v1566 = vpop.permute.xlu0 %1565
        %1567 = vrot.lane.b32.xlu0 %v461, 15
        %v1568 = vpop.permute.xlu0 %1567
        %1569 = vrot.lane.b32.xlu0 %v462, 15
        %v1570 = vpop.permute.xlu0 %1569
        %1571 = vrot.lane.b32.xlu0 %v463, 15
        %v1572 = vpop.permute.xlu0 %1571
        %1573 = vrot.lane.b32.xlu0 %v464, 15
        %v1574 = vpop.permute.xlu0 %1573
        %1575 = vrot.lane.b32.xlu0 %v465, 15
        %v1576 = vpop.permute.xlu0 %1575
        %1577 = vrot.lane.b32.xlu0 %v466, 15
        %v1578 = vpop.permute.xlu0 %1577
        %1579 = vrot.lane.b32.xlu0 %v467, 15
        %v1580 = vpop.permute.xlu0 %1579
        %1581 = vrot.lane.b32.xlu0 %v468, 15
        %v1582 = vpop.permute.xlu0 %1581
        %1583 = vrot.lane.b32.xlu0 %v469, 15
        %v1584 = vpop.permute.xlu0 %1583
        %1585 = vrot.lane.b32.xlu0 %v470, 15
        %v1586 = vpop.permute.xlu0 %1585
        %1587 = vrot.lane.b32.xlu0 %v471, 15
        %v1588 = vpop.permute.xlu0 %1587
        %1589 = vrot.lane.b32.xlu0 %v472, 15
        %v1590 = vpop.permute.xlu0 %1589
        %1591 = vrot.lane.b32.xlu0 %v473, 15
        %v1592 = vpop.permute.xlu0 %1591
        %1593 = vrot.lane.b32.xlu0 %v474, 15
        %v1594 = vpop.permute.xlu0 %1593
        %1627 = vrot.lane.b32.xlu0 %v411, 18
        %v1628 = vpop.permute.xlu0 %1627
        %1629 = vrot.lane.b32.xlu0 %v412, 18
        %v1630 = vpop.permute.xlu0 %1629
        %1631 = vrot.lane.b32.xlu0 %v413, 18
        %v1632 = vpop.permute.xlu0 %1631
        %1633 = vrot.lane.b32.xlu0 %v414, 18
        %v1634 = vpop.permute.xlu0 %1633
        %1635 = vrot.lane.b32.xlu0 %v415, 18
        %v1636 = vpop.permute.xlu0 %1635
        %1637 = vrot.lane.b32.xlu0 %v416, 18
        %v1638 = vpop.permute.xlu0 %1637
        %1639 = vrot.lane.b32.xlu0 %v417, 18
        %v1640 = vpop.permute.xlu0 %1639
        %1641 = vrot.lane.b32.xlu0 %v418, 18
        %v1642 = vpop.permute.xlu0 %1641
        %1643 = vrot.lane.b32.xlu0 %v419, 18
        %v1644 = vpop.permute.xlu0 %1643
        %1645 = vrot.lane.b32.xlu0 %v420, 18
        %v1646 = vpop.permute.xlu0 %1645
        %1647 = vrot.lane.b32.xlu0 %v421, 18
        %v1648 = vpop.permute.xlu0 %1647
        %1649 = vrot.lane.b32.xlu0 %v422, 18
        %v1650 = vpop.permute.xlu0 %1649
        %1651 = vrot.lane.b32.xlu0 %v423, 18
        %v1652 = vpop.permute.xlu0 %1651
        %1653 = vrot.lane.b32.xlu0 %v424, 18
        %v1654 = vpop.permute.xlu0 %1653
        %1655 = vrot.lane.b32.xlu0 %v425, 18
        %v1656 = vpop.permute.xlu0 %1655
        %1657 = vrot.lane.b32.xlu0 %v426, 18
        %v1658 = vpop.permute.xlu0 %1657
        %1659 = vrot.lane.b32.xlu0 %v427, 18
        %v1660 = vpop.permute.xlu0 %1659
        %1661 = vrot.lane.b32.xlu0 %v428, 18
        %v1662 = vpop.permute.xlu0 %1661
        %1663 = vrot.lane.b32.xlu0 %v429, 18
        %v1664 = vpop.permute.xlu0 %1663
        %1665 = vrot.lane.b32.xlu0 %v430, 18
        %v1666 = vpop.permute.xlu0 %1665
        %1667 = vrot.lane.b32.xlu0 %v431, 18
        %v1668 = vpop.permute.xlu0 %1667
        %1669 = vrot.lane.b32.xlu0 %v432, 18
        %v1670 = vpop.permute.xlu0 %1669
        %1671 = vrot.lane.b32.xlu0 %v433, 18
        %v1672 = vpop.permute.xlu0 %1671
        %1673 = vrot.lane.b32.xlu0 %v434, 18
        %v1674 = vpop.permute.xlu0 %1673
        %1675 = vrot.lane.b32.xlu0 %v435, 18
        %v1676 = vpop.permute.xlu0 %1675
        %1677 = vrot.lane.b32.xlu0 %v436, 18
        %v1678 = vpop.permute.xlu0 %1677
        %1679 = vrot.lane.b32.xlu0 %v437, 18
        %v1680 = vpop.permute.xlu0 %1679
        %1681 = vrot.lane.b32.xlu0 %v438, 18
        %v1682 = vpop.permute.xlu0 %1681
        %1683 = vrot.lane.b32.xlu0 %v439, 18
        %v1684 = vpop.permute.xlu0 %1683
        %1685 = vrot.lane.b32.xlu0 %v440, 18
        %v1686 = vpop.permute.xlu0 %1685
        %1687 = vrot.lane.b32.xlu0 %v441, 18
        %v1688 = vpop.permute.xlu0 %1687
        %1689 = vrot.lane.b32.xlu0 %v442, 18
        %v1690 = vpop.permute.xlu0 %1689
        %1755 = vrot.lane.b32.xlu0 %v635, 19
        %v1756 = vpop.permute.xlu0 %1755
        %1757 = vrot.lane.b32.xlu0 %v636, 19
        %v1758 = vpop.permute.xlu0 %1757
        %1759 = vrot.lane.b32.xlu0 %v637, 19
        %v1760 = vpop.permute.xlu0 %1759
        %1761 = vrot.lane.b32.xlu0 %v638, 19
        %v1762 = vpop.permute.xlu0 %1761
        %1763 = vrot.lane.b32.xlu0 %v639, 19
        %v1764 = vpop.permute.xlu0 %1763
        %1765 = vrot.lane.b32.xlu0 %v640, 19
        %v1766 = vpop.permute.xlu0 %1765
        %1767 = vrot.lane.b32.xlu0 %v641, 19
        %v1768 = vpop.permute.xlu0 %1767
        %1769 = vrot.lane.b32.xlu0 %v642, 19
        %v1770 = vpop.permute.xlu0 %1769
        %1771 = vrot.lane.b32.xlu0 %v643, 19
        %v1772 = vpop.permute.xlu0 %1771
        %1773 = vrot.lane.b32.xlu0 %v644, 19
        %v1774 = vpop.permute.xlu0 %1773
        %1775 = vrot.lane.b32.xlu0 %v645, 19
        %v1776 = vpop.permute.xlu0 %1775
        %1777 = vrot.lane.b32.xlu0 %v646, 19
        %v1778 = vpop.permute.xlu0 %1777
        %1779 = vrot.lane.b32.xlu0 %v647, 19
        %v1780 = vpop.permute.xlu0 %1779
        %1781 = vrot.lane.b32.xlu0 %v648, 19
        %v1782 = vpop.permute.xlu0 %1781
        %1783 = vrot.lane.b32.xlu0 %v649, 19
        %v1784 = vpop.permute.xlu0 %1783
        %1785 = vrot.lane.b32.xlu0 %v650, 19
        %v1786 = vpop.permute.xlu0 %1785
        %1787 = vrot.lane.b32.xlu0 %v651, 19
        %v1788 = vpop.permute.xlu0 %1787
        %1789 = vrot.lane.b32.xlu0 %v652, 19
        %v1790 = vpop.permute.xlu0 %1789
        %1791 = vrot.lane.b32.xlu0 %v653, 19
        %v1792 = vpop.permute.xlu0 %1791
        %1793 = vrot.lane.b32.xlu0 %v654, 19
        %v1794 = vpop.permute.xlu0 %1793
        %1795 = vrot.lane.b32.xlu0 %v655, 19
        %v1796 = vpop.permute.xlu0 %1795
        %1797 = vrot.lane.b32.xlu0 %v656, 19
        %v1798 = vpop.permute.xlu0 %1797
        %1799 = vrot.lane.b32.xlu0 %v657, 19
        %v1800 = vpop.permute.xlu0 %1799
        %1801 = vrot.lane.b32.xlu0 %v658, 19
        %v1802 = vpop.permute.xlu0 %1801
        %1803 = vrot.lane.b32.xlu0 %v659, 19
        %v1804 = vpop.permute.xlu0 %1803
        %1805 = vrot.lane.b32.xlu0 %v660, 19
        %v1806 = vpop.permute.xlu0 %1805
        %1807 = vrot.lane.b32.xlu0 %v661, 19
        %v1808 = vpop.permute.xlu0 %1807
        %1809 = vrot.lane.b32.xlu0 %v662, 19
        %v1810 = vpop.permute.xlu0 %1809
        %1811 = vrot.lane.b32.xlu0 %v663, 19
        %v1812 = vpop.permute.xlu0 %1811
        %1813 = vrot.lane.b32.xlu0 %v664, 19
        %v1814 = vpop.permute.xlu0 %1813
        %1815 = vrot.lane.b32.xlu0 %v665, 19
        %v1816 = vpop.permute.xlu0 %1815
        %1817 = vrot.lane.b32.xlu0 %v666, 19
        %v1818 = vpop.permute.xlu0 %1817
        %1883 = vrot.lane.b32.xlu0 %v667, 19
        %v1884 = vpop.permute.xlu0 %1883
        %1885 = vrot.lane.b32.xlu0 %v668, 19
        %v1886 = vpop.permute.xlu0 %1885
        %1887 = vrot.lane.b32.xlu0 %v669, 19
        %v1888 = vpop.permute.xlu0 %1887
        %1889 = vrot.lane.b32.xlu0 %v670, 19
        %v1890 = vpop.permute.xlu0 %1889
        %1891 = vrot.lane.b32.xlu0 %v671, 19
        %v1892 = vpop.permute.xlu0 %1891
        %1893 = vrot.lane.b32.xlu0 %v672, 19
        %v1894 = vpop.permute.xlu0 %1893
        %1895 = vrot.lane.b32.xlu0 %v673, 19
        %v1896 = vpop.permute.xlu0 %1895
        %1897 = vrot.lane.b32.xlu0 %v674, 19
        %v1898 = vpop.permute.xlu0 %1897
        %1899 = vrot.lane.b32.xlu0 %v675, 19
        %v1900 = vpop.permute.xlu0 %1899
        %1901 = vrot.lane.b32.xlu0 %v676, 19
        %v1902 = vpop.permute.xlu0 %1901
        %1903 = vrot.lane.b32.xlu0 %v677, 19
        %v1904 = vpop.permute.xlu0 %1903
        %1905 = vrot.lane.b32.xlu0 %v678, 19
        %v1906 = vpop.permute.xlu0 %1905
        %1907 = vrot.lane.b32.xlu0 %v679, 19
        %v1908 = vpop.permute.xlu0 %1907
        %1909 = vrot.lane.b32.xlu0 %v680, 19
        %v1910 = vpop.permute.xlu0 %1909
        %1911 = vrot.lane.b32.xlu0 %v681, 19
        %v1912 = vpop.permute.xlu0 %1911
        %1913 = vrot.lane.b32.xlu0 %v682, 19
        %v1914 = vpop.permute.xlu0 %1913
        %1915 = vrot.lane.b32.xlu0 %v683, 19
        %v1916 = vpop.permute.xlu0 %1915
        %1917 = vrot.lane.b32.xlu0 %v684, 19
        %v1918 = vpop.permute.xlu0 %1917
        %1919 = vrot.lane.b32.xlu0 %v685, 19
        %v1920 = vpop.permute.xlu0 %1919
        %1921 = vrot.lane.b32.xlu0 %v686, 19
        %v1922 = vpop.permute.xlu0 %1921
        %1923 = vrot.lane.b32.xlu0 %v687, 19
        %v1924 = vpop.permute.xlu0 %1923
        %1925 = vrot.lane.b32.xlu0 %v688, 19
        %v1926 = vpop.permute.xlu0 %1925
        %1927 = vrot.lane.b32.xlu0 %v689, 19
        %v1928 = vpop.permute.xlu0 %1927
        %1929 = vrot.lane.b32.xlu0 %v690, 19
        %v1930 = vpop.permute.xlu0 %1929
        %1931 = vrot.lane.b32.xlu0 %v691, 19
        %v1932 = vpop.permute.xlu0 %1931
        %1933 = vrot.lane.b32.xlu0 %v692, 19
        %v1934 = vpop.permute.xlu0 %1933
        %1935 = vrot.lane.b32.xlu0 %v693, 19
        %v1936 = vpop.permute.xlu0 %1935
        %1937 = vrot.lane.b32.xlu0 %v694, 19
        %v1938 = vpop.permute.xlu0 %1937
        %1939 = vrot.lane.b32.xlu0 %v695, 19
        %v1940 = vpop.permute.xlu0 %1939
        %1941 = vrot.lane.b32.xlu0 %v696, 19
        %v1942 = vpop.permute.xlu0 %1941
        %1943 = vrot.lane.b32.xlu0 %v697, 19
        %v1944 = vpop.permute.xlu0 %1943
        %1945 = vrot.lane.b32.xlu0 %v698, 19
        %v1946 = vpop.permute.xlu0 %1945
        %2011 = vrot.lane.b32.xlu0 %v1019, 19
        %v2012 = vpop.permute.xlu0 %2011
        %2013 = vrot.lane.b32.xlu0 %v1020, 19
        %v2014 = vpop.permute.xlu0 %2013
        %2015 = vrot.lane.b32.xlu0 %v1021, 19
        %v2016 = vpop.permute.xlu0 %2015
        %2017 = vrot.lane.b32.xlu0 %v1022, 19
        %v2018 = vpop.permute.xlu0 %2017
        %2019 = vrot.lane.b32.xlu0 %v1023, 19
        %v2020 = vpop.permute.xlu0 %2019
        %2021 = vrot.lane.b32.xlu0 %v1024, 19
        %v2022 = vpop.permute.xlu0 %2021
        %2023 = vrot.lane.b32.xlu0 %v1025, 19
        %v2024 = vpop.permute.xlu0 %2023
        %2025 = vrot.lane.b32.xlu0 %v1026, 19
        %v2026 = vpop.permute.xlu0 %2025
        %2027 = vrot.lane.b32.xlu0 %v1027, 19
        %v2028 = vpop.permute.xlu0 %2027
        %2029 = vrot.lane.b32.xlu0 %v1028, 19
        %v2030 = vpop.permute.xlu0 %2029
        %2031 = vrot.lane.b32.xlu0 %v1029, 19
        %v2032 = vpop.permute.xlu0 %2031
        %2033 = vrot.lane.b32.xlu0 %v1030, 19
        %v2034 = vpop.permute.xlu0 %2033
        %2035 = vrot.lane.b32.xlu0 %v1031, 19
        %v2036 = vpop.permute.xlu0 %2035
        %2037 = vrot.lane.b32.xlu0 %v1032, 19
        %v2038 = vpop.permute.xlu0 %2037
        %2039 = vrot.lane.b32.xlu0 %v1033, 19
        %v2040 = vpop.permute.xlu0 %2039
        %2041 = vrot.lane.b32.xlu0 %v1034, 19
        %v2042 = vpop.permute.xlu0 %2041
        %2043 = vrot.lane.b32.xlu0 %v1035, 19
        %v2044 = vpop.permute.xlu0 %2043
        %2045 = vrot.lane.b32.xlu0 %v1036, 19
        %v2046 = vpop.permute.xlu0 %2045
        %2047 = vrot.lane.b32.xlu0 %v1037, 19
        %v2048 = vpop.permute.xlu0 %2047
        %2049 = vrot.lane.b32.xlu0 %v1038, 19
        %v2050 = vpop.permute.xlu0 %2049
        %2051 = vrot.lane.b32.xlu0 %v1039, 19
        %v2052 = vpop.permute.xlu0 %2051
        %2053 = vrot.lane.b32.xlu0 %v1040, 19
        %v2054 = vpop.permute.xlu0 %2053
        %2055 = vrot.lane.b32.xlu0 %v1041, 19
        %v2056 = vpop.permute.xlu0 %2055
        %2057 = vrot.lane.b32.xlu0 %v1042, 19
        %v2058 = vpop.permute.xlu0 %2057
        %2059 = vrot.lane.b32.xlu0 %v1043, 19
        %v2060 = vpop.permute.xlu0 %2059
        %2061 = vrot.lane.b32.xlu0 %v1044, 19
        %v2062 = vpop.permute.xlu0 %2061
        %2063 = vrot.lane.b32.xlu0 %v1045, 19
        %v2064 = vpop.permute.xlu0 %2063
        %2065 = vrot.lane.b32.xlu0 %v1046, 19
        %v2066 = vpop.permute.xlu0 %2065
        %2067 = vrot.lane.b32.xlu0 %v1047, 19
        %v2068 = vpop.permute.xlu0 %2067
        %2069 = vrot.lane.b32.xlu0 %v1048, 19
        %v2070 = vpop.permute.xlu0 %2069
        %2071 = vrot.lane.b32.xlu0 %v1049, 19
        %v2072 = vpop.permute.xlu0 %2071
        %2073 = vrot.lane.b32.xlu0 %v1050, 19
        %v2074 = vpop.permute.xlu0 %2073
        %2139 = vrot.lane.b32.xlu0 %v1179, 22
        %v2140 = vpop.permute.xlu0 %2139
        %2141 = vrot.lane.b32.xlu0 %v1180, 22
        %v2142 = vpop.permute.xlu0 %2141
        %2143 = vrot.lane.b32.xlu0 %v1181, 22
        %v2144 = vpop.permute.xlu0 %2143
        %2145 = vrot.lane.b32.xlu0 %v1182, 22
        %v2146 = vpop.permute.xlu0 %2145
        %2147 = vrot.lane.b32.xlu0 %v1183, 22
        %v2148 = vpop.permute.xlu0 %2147
        %2149 = vrot.lane.b32.xlu0 %v1184, 22
        %v2150 = vpop.permute.xlu0 %2149
        %2151 = vrot.lane.b32.xlu0 %v1185, 22
        %v2152 = vpop.permute.xlu0 %2151
        %2153 = vrot.lane.b32.xlu0 %v1186, 22
        %v2154 = vpop.permute.xlu0 %2153
        %2155 = vrot.lane.b32.xlu0 %v1187, 22
        %v2156 = vpop.permute.xlu0 %2155
        %2157 = vrot.lane.b32.xlu0 %v1188, 22
        %v2158 = vpop.permute.xlu0 %2157
        %2159 = vrot.lane.b32.xlu0 %v1189, 22
        %v2160 = vpop.permute.xlu0 %2159
        %2161 = vrot.lane.b32.xlu0 %v1190, 22
        %v2162 = vpop.permute.xlu0 %2161
        %2163 = vrot.lane.b32.xlu0 %v1191, 22
        %v2164 = vpop.permute.xlu0 %2163
        %2165 = vrot.lane.b32.xlu0 %v1192, 22
        %v2166 = vpop.permute.xlu0 %2165
        %2167 = vrot.lane.b32.xlu0 %v1193, 22
        %v2168 = vpop.permute.xlu0 %2167
        %2169 = vrot.lane.b32.xlu0 %v1194, 22
        %v2170 = vpop.permute.xlu0 %2169
        %2171 = vrot.lane.b32.xlu0 %v1195, 22
        %v2172 = vpop.permute.xlu0 %2171
        %2173 = vrot.lane.b32.xlu0 %v1196, 22
        %v2174 = vpop.permute.xlu0 %2173
        %2175 = vrot.lane.b32.xlu0 %v1197, 22
        %v2176 = vpop.permute.xlu0 %2175
        %2177 = vrot.lane.b32.xlu0 %v1198, 22
        %v2178 = vpop.permute.xlu0 %2177
        %2179 = vrot.lane.b32.xlu0 %v1199, 22
        %v2180 = vpop.permute.xlu0 %2179
        %2181 = vrot.lane.b32.xlu0 %v1200, 22
        %v2182 = vpop.permute.xlu0 %2181
        %2183 = vrot.lane.b32.xlu0 %v1201, 22
        %v2184 = vpop.permute.xlu0 %2183
        %2185 = vrot.lane.b32.xlu0 %v1202, 22
        %v2186 = vpop.permute.xlu0 %2185
        %2187 = vrot.lane.b32.xlu0 %v1203, 22
        %v2188 = vpop.permute.xlu0 %2187
        %2189 = vrot.lane.b32.xlu0 %v1204, 22
        %v2190 = vpop.permute.xlu0 %2189
        %2191 = vrot.lane.b32.xlu0 %v1205, 22
        %v2192 = vpop.permute.xlu0 %2191
        %2193 = vrot.lane.b32.xlu0 %v1206, 22
        %v2194 = vpop.permute.xlu0 %2193
        %2195 = vrot.lane.b32.xlu0 %v1207, 22
        %v2196 = vpop.permute.xlu0 %2195
        %2197 = vrot.lane.b32.xlu0 %v1208, 22
        %v2198 = vpop.permute.xlu0 %2197
        %2199 = vrot.lane.b32.xlu0 %v1209, 22
        %v2200 = vpop.permute.xlu0 %2199
        %2201 = vrot.lane.b32.xlu0 %v1210, 22
        %v2202 = vpop.permute.xlu0 %2201
        %2267 = vrot.lane.b32.xlu0 %v1339, 23
        %v2268 = vpop.permute.xlu0 %2267
        %2269 = vrot.lane.b32.xlu0 %v1340, 23
        %v2270 = vpop.permute.xlu0 %2269
        %2271 = vrot.lane.b32.xlu0 %v1341, 23
        %v2272 = vpop.permute.xlu0 %2271
        %2273 = vrot.lane.b32.xlu0 %v1342, 23
        %v2274 = vpop.permute.xlu0 %2273
        %2275 = vrot.lane.b32.xlu0 %v1343, 23
        %v2276 = vpop.permute.xlu0 %2275
        %2277 = vrot.lane.b32.xlu0 %v1344, 23
        %v2278 = vpop.permute.xlu0 %2277
        %2279 = vrot.lane.b32.xlu0 %v1345, 23
        %v2280 = vpop.permute.xlu0 %2279
        %2281 = vrot.lane.b32.xlu0 %v1346, 23
        %v2282 = vpop.permute.xlu0 %2281
        %2283 = vrot.lane.b32.xlu0 %v1347, 23
        %v2284 = vpop.permute.xlu0 %2283
        %2285 = vrot.lane.b32.xlu0 %v1348, 23
        %v2286 = vpop.permute.xlu0 %2285
        %2287 = vrot.lane.b32.xlu0 %v1349, 23
        %v2288 = vpop.permute.xlu0 %2287
        %2289 = vrot.lane.b32.xlu0 %v1350, 23
        %v2290 = vpop.permute.xlu0 %2289
        %2291 = vrot.lane.b32.xlu0 %v1351, 23
        %v2292 = vpop.permute.xlu0 %2291
        %2293 = vrot.lane.b32.xlu0 %v1352, 23
        %v2294 = vpop.permute.xlu0 %2293
        %2295 = vrot.lane.b32.xlu0 %v1353, 23
        %v2296 = vpop.permute.xlu0 %2295
        %2297 = vrot.lane.b32.xlu0 %v1354, 23
        %v2298 = vpop.permute.xlu0 %2297
        %2299 = vrot.lane.b32.xlu0 %v1355, 23
        %v2300 = vpop.permute.xlu0 %2299
        %2301 = vrot.lane.b32.xlu0 %v1356, 23
        %v2302 = vpop.permute.xlu0 %2301
        %2303 = vrot.lane.b32.xlu0 %v1357, 23
        %v2304 = vpop.permute.xlu0 %2303
        %2305 = vrot.lane.b32.xlu0 %v1358, 23
        %v2306 = vpop.permute.xlu0 %2305
        %2307 = vrot.lane.b32.xlu0 %v1359, 23
        %v2308 = vpop.permute.xlu0 %2307
        %2309 = vrot.lane.b32.xlu0 %v1360, 23
        %v2310 = vpop.permute.xlu0 %2309
        %2311 = vrot.lane.b32.xlu0 %v1361, 23
        %v2312 = vpop.permute.xlu0 %2311
        %2313 = vrot.lane.b32.xlu0 %v1362, 23
        %v2314 = vpop.permute.xlu0 %2313
        %2315 = vrot.lane.b32.xlu0 %v1363, 23
        %v2316 = vpop.permute.xlu0 %2315
        %2317 = vrot.lane.b32.xlu0 %v1364, 23
        %v2318 = vpop.permute.xlu0 %2317
        %2319 = vrot.lane.b32.xlu0 %v1365, 23
        %v2320 = vpop.permute.xlu0 %2319
        %2321 = vrot.lane.b32.xlu0 %v1366, 23
        %v2322 = vpop.permute.xlu0 %2321
        %2323 = vrot.lane.b32.xlu0 %v1367, 23
        %v2324 = vpop.permute.xlu0 %2323
        %2325 = vrot.lane.b32.xlu0 %v1368, 23
        %v2326 = vpop.permute.xlu0 %2325
        %2327 = vrot.lane.b32.xlu0 %v1369, 23
        %v2328 = vpop.permute.xlu0 %2327
        %2329 = vrot.lane.b32.xlu0 %v1370, 23
        %v2330 = vpop.permute.xlu0 %2329
        %vm2363 = vcmask 130048
        %v2364 = vsel %vm2363, %v315, %v1404
        %v2365 = vsel %vm2363, %v316, %v1406
        %v2366 = vsel %vm2363, %v317, %v1408
        %v2367 = vsel %vm2363, %v318, %v1410
        %v2368 = vsel %vm2363, %v319, %v1412
        %v2369 = vsel %vm2363, %v320, %v1414
        %v2370 = vsel %vm2363, %v321, %v1416
        %v2371 = vsel %vm2363, %v322, %v1418
        %v2372 = vsel %vm2363, %v323, %v1420
        %v2373 = vsel %vm2363, %v324, %v1422
        %v2374 = vsel %vm2363, %v325, %v1424
        %v2375 = vsel %vm2363, %v326, %v1426
        %v2376 = vsel %vm2363, %v327, %v1428
        %v2377 = vsel %vm2363, %v328, %v1430
        %v2378 = vsel %vm2363, %v329, %v1432
        %v2379 = vsel %vm2363, %v330, %v1434
        %v2380 = vsel %vm2363, %v331, %v1436
        %v2381 = vsel %vm2363, %v332, %v1438
        %v2382 = vsel %vm2363, %v333, %v1440
        %v2383 = vsel %vm2363, %v334, %v1442
        %v2384 = vsel %vm2363, %v335, %v1444
        %v2385 = vsel %vm2363, %v336, %v1446
        %v2386 = vsel %vm2363, %v337, %v1448
        %v2387 = vsel %vm2363, %v338, %v1450
        %v2388 = vsel %vm2363, %v339, %v1452
        %v2389 = vsel %vm2363, %v340, %v1454
        %v2390 = vsel %vm2363, %v341, %v1456
        %v2391 = vsel %vm2363, %v342, %v1458
        %v2392 = vsel %vm2363, %v343, %v1460
        %v2393 = vsel %vm2363, %v344, %v1462
        %v2394 = vsel %vm2363, %v345, %v1464
        %v2395 = vsel %vm2363, %v346, %v1466
        %vm2396 = vcmask 138240
        %v2397 = vsel %vm2396, %v2364, %v1532
        %v2398 = vsel %vm2396, %v2365, %v1534
        %v2399 = vsel %vm2396, %v2366, %v1536
        %v2400 = vsel %vm2396, %v2367, %v1538
        %v2401 = vsel %vm2396, %v2368, %v1540
        %v2402 = vsel %vm2396, %v2369, %v1542
        %v2403 = vsel %vm2396, %v2370, %v1544
        %v2404 = vsel %vm2396, %v2371, %v1546
        %v2405 = vsel %vm2396, %v2372, %v1548
        %v2406 = vsel %vm2396, %v2373, %v1550
        %v2407 = vsel %vm2396, %v2374, %v1552
        %v2408 = vsel %vm2396, %v2375, %v1554
        %v2409 = vsel %vm2396, %v2376, %v1556
        %v2410 = vsel %vm2396, %v2377, %v1558
        %v2411 = vsel %vm2396, %v2378, %v1560
        %v2412 = vsel %vm2396, %v2379, %v1562
        %v2413 = vsel %vm2396, %v2380, %v1564
        %v2414 = vsel %vm2396, %v2381, %v1566
        %v2415 = vsel %vm2396, %v2382, %v1568
        %v2416 = vsel %vm2396, %v2383, %v1570
        %v2417 = vsel %vm2396, %v2384, %v1572
        %v2418 = vsel %vm2396, %v2385, %v1574
        %v2419 = vsel %vm2396, %v2386, %v1576
        %v2420 = vsel %vm2396, %v2387, %v1578
        %v2421 = vsel %vm2396, %v2388, %v1580
        %v2422 = vsel %vm2396, %v2389, %v1582
        %v2423 = vsel %vm2396, %v2390, %v1584
        %v2424 = vsel %vm2396, %v2391, %v1586
        %v2425 = vsel %vm2396, %v2392, %v1588
        %v2426 = vsel %vm2396, %v2393, %v1590
        %v2427 = vsel %vm2396, %v2394, %v1592
        %v2428 = vsel %vm2396, %v2395, %v1594
        %vm2429 = vcmask 146432
        %v2430 = vsel %vm2429, %v2397, %v1628
        %v2431 = vsel %vm2429, %v2398, %v1630
        %v2432 = vsel %vm2429, %v2399, %v1632
        %v2433 = vsel %vm2429, %v2400, %v1634
        %v2434 = vsel %vm2429, %v2401, %v1636
        %v2435 = vsel %vm2429, %v2402, %v1638
        %v2436 = vsel %vm2429, %v2403, %v1640
        %v2437 = vsel %vm2429, %v2404, %v1642
        %v2438 = vsel %vm2429, %v2405, %v1644
        %v2439 = vsel %vm2429, %v2406, %v1646
        %v2440 = vsel %vm2429, %v2407, %v1648
        %v2441 = vsel %vm2429, %v2408, %v1650
        %v2442 = vsel %vm2429, %v2409, %v1652
        %v2443 = vsel %vm2429, %v2410, %v1654
        %v2444 = vsel %vm2429, %v2411, %v1656
        %v2445 = vsel %vm2429, %v2412, %v1658
        %v2446 = vsel %vm2429, %v2413, %v1660
        %v2447 = vsel %vm2429, %v2414, %v1662
        %v2448 = vsel %vm2429, %v2415, %v1664
        %v2449 = vsel %vm2429, %v2416, %v1666
        %v2450 = vsel %vm2429, %v2417, %v1668
        %v2451 = vsel %vm2429, %v2418, %v1670
        %v2452 = vsel %vm2429, %v2419, %v1672
        %v2453 = vsel %vm2429, %v2420, %v1674
        %v2454 = vsel %vm2429, %v2421, %v1676
        %v2455 = vsel %vm2429, %v2422, %v1678
        %v2456 = vsel %vm2429, %v2423, %v1680
        %v2457 = vsel %vm2429, %v2424, %v1682
        %v2458 = vsel %vm2429, %v2425, %v1684
        %v2459 = vsel %vm2429, %v2426, %v1686
        %v2460 = vsel %vm2429, %v2427, %v1688
        %v2461 = vsel %vm2429, %v2428, %v1690
        %vm2462 = vcmask 154624
        %v2463 = vsel %vm2462, %v2430, %v1756
        %v2464 = vsel %vm2462, %v2431, %v1758
        %v2465 = vsel %vm2462, %v2432, %v1760
        %v2466 = vsel %vm2462, %v2433, %v1762
        %v2467 = vsel %vm2462, %v2434, %v1764
        %v2468 = vsel %vm2462, %v2435, %v1766
        %v2469 = vsel %vm2462, %v2436, %v1768
        %v2470 = vsel %vm2462, %v2437, %v1770
        %v2471 = vsel %vm2462, %v2438, %v1772
        %v2472 = vsel %vm2462, %v2439, %v1774
        %v2473 = vsel %vm2462, %v2440, %v1776
        %v2474 = vsel %vm2462, %v2441, %v1778
        %v2475 = vsel %vm2462, %v2442, %v1780
        %v2476 = vsel %vm2462, %v2443, %v1782
        %v2477 = vsel %vm2462, %v2444, %v1784
        %v2478 = vsel %vm2462, %v2445, %v1786
        %v2479 = vsel %vm2462, %v2446, %v1788
        %v2480 = vsel %vm2462, %v2447, %v1790
        %v2481 = vsel %vm2462, %v2448, %v1792
        %v2482 = vsel %vm2462, %v2449, %v1794
        %v2483 = vsel %vm2462, %v2450, %v1796
        %v2484 = vsel %vm2462, %v2451, %v1798
        %v2485 = vsel %vm2462, %v2452, %v1800
        %v2486 = vsel %vm2462, %v2453, %v1802
        %v2487 = vsel %vm2462, %v2454, %v1804
        %v2488 = vsel %vm2462, %v2455, %v1806
        %v2489 = vsel %vm2462, %v2456, %v1808
        %v2490 = vsel %vm2462, %v2457, %v1810
        %v2491 = vsel %vm2462, %v2458, %v1812
        %v2492 = vsel %vm2462, %v2459, %v1814
        %v2493 = vsel %vm2462, %v2460, %v1816
        %v2494 = vsel %vm2462, %v2461, %v1818
        %vm2495 = vcmask 162816
        %v2496 = vsel %vm2495, %v2463, %v1884
        %v2497 = vsel %vm2495, %v2464, %v1886
        %v2498 = vsel %vm2495, %v2465, %v1888
        %v2499 = vsel %vm2495, %v2466, %v1890
        %v2500 = vsel %vm2495, %v2467, %v1892
        %v2501 = vsel %vm2495, %v2468, %v1894
        %v2502 = vsel %vm2495, %v2469, %v1896
        %v2503 = vsel %vm2495, %v2470, %v1898
        %v2504 = vsel %vm2495, %v2471, %v1900
        %v2505 = vsel %vm2495, %v2472, %v1902
        %v2506 = vsel %vm2495, %v2473, %v1904
        %v2507 = vsel %vm2495, %v2474, %v1906
        %v2508 = vsel %vm2495, %v2475, %v1908
        %v2509 = vsel %vm2495, %v2476, %v1910
        %v2510 = vsel %vm2495, %v2477, %v1912
        %v2511 = vsel %vm2495, %v2478, %v1914
        %v2512 = vsel %vm2495, %v2479, %v1916
        %v2513 = vsel %vm2495, %v2480, %v1918
        %v2514 = vsel %vm2495, %v2481, %v1920
        %v2515 = vsel %vm2495, %v2482, %v1922
        %v2516 = vsel %vm2495, %v2483, %v1924
        %v2517 = vsel %vm2495, %v2484, %v1926
        %v2518 = vsel %vm2495, %v2485, %v1928
        %v2519 = vsel %vm2495, %v2486, %v1930
        %v2520 = vsel %vm2495, %v2487, %v1932
        %v2521 = vsel %vm2495, %v2488, %v1934
        %v2522 = vsel %vm2495, %v2489, %v1936
        %v2523 = vsel %vm2495, %v2490, %v1938
        %v2524 = vsel %vm2495, %v2491, %v1940
        %v2525 = vsel %vm2495, %v2492, %v1942
        %v2526 = vsel %vm2495, %v2493, %v1944
        %v2527 = vsel %vm2495, %v2494, %v1946
        %vm2528 = vcmask 171008
        %v2529 = vsel %vm2528, %v2496, %v2012
        %v2530 = vsel %vm2528, %v2497, %v2014
        %v2531 = vsel %vm2528, %v2498, %v2016
        %v2532 = vsel %vm2528, %v2499, %v2018
        %v2533 = vsel %vm2528, %v2500, %v2020
        %v2534 = vsel %vm2528, %v2501, %v2022
        %v2535 = vsel %vm2528, %v2502, %v2024
        %v2536 = vsel %vm2528, %v2503, %v2026
        %v2537 = vsel %vm2528, %v2504, %v2028
        %v2538 = vsel %vm2528, %v2505, %v2030
        %v2539 = vsel %vm2528, %v2506, %v2032
        %v2540 = vsel %vm2528, %v2507, %v2034
        %v2541 = vsel %vm2528, %v2508, %v2036
        %v2542 = vsel %vm2528, %v2509, %v2038
        %v2543 = vsel %vm2528, %v2510, %v2040
        %v2544 = vsel %vm2528, %v2511, %v2042
        %v2545 = vsel %vm2528, %v2512, %v2044
        %v2546 = vsel %vm2528, %v2513, %v2046
        %v2547 = vsel %vm2528, %v2514, %v2048
        %v2548 = vsel %vm2528, %v2515, %v2050
        %v2549 = vsel %vm2528, %v2516, %v2052
        %v2550 = vsel %vm2528, %v2517, %v2054
        %v2551 = vsel %vm2528, %v2518, %v2056
        %v2552 = vsel %vm2528, %v2519, %v2058
        %v2553 = vsel %vm2528, %v2520, %v2060
        %v2554 = vsel %vm2528, %v2521, %v2062
        %v2555 = vsel %vm2528, %v2522, %v2064
        %v2556 = vsel %vm2528, %v2523, %v2066
        %v2557 = vsel %vm2528, %v2524, %v2068
        %v2558 = vsel %vm2528, %v2525, %v2070
        %v2559 = vsel %vm2528, %v2526, %v2072
        %v2560 = vsel %vm2528, %v2527, %v2074
        %vm2561 = vcmask 179200
        %v2562 = vsel %vm2561, %v2529, %v2140
        %v2563 = vsel %vm2561, %v2530, %v2142
        %v2564 = vsel %vm2561, %v2531, %v2144
        %v2565 = vsel %vm2561, %v2532, %v2146
        %v2566 = vsel %vm2561, %v2533, %v2148
        %v2567 = vsel %vm2561, %v2534, %v2150
        %v2568 = vsel %vm2561, %v2535, %v2152
        %v2569 = vsel %vm2561, %v2536, %v2154
        %v2570 = vsel %vm2561, %v2537, %v2156
        %v2571 = vsel %vm2561, %v2538, %v2158
        %v2572 = vsel %vm2561, %v2539, %v2160
        %v2573 = vsel %vm2561, %v2540, %v2162
        %v2574 = vsel %vm2561, %v2541, %v2164
        %v2575 = vsel %vm2561, %v2542, %v2166
        %v2576 = vsel %vm2561, %v2543, %v2168
        %v2577 = vsel %vm2561, %v2544, %v2170
        %v2578 = vsel %vm2561, %v2545, %v2172
        %v2579 = vsel %vm2561, %v2546, %v2174
        %v2580 = vsel %vm2561, %v2547, %v2176
        %v2581 = vsel %vm2561, %v2548, %v2178
        %v2582 = vsel %vm2561, %v2549, %v2180
        %v2583 = vsel %vm2561, %v2550, %v2182
        %v2584 = vsel %vm2561, %v2551, %v2184
        %v2585 = vsel %vm2561, %v2552, %v2186
        %v2586 = vsel %vm2561, %v2553, %v2188
        %v2587 = vsel %vm2561, %v2554, %v2190
        %v2588 = vsel %vm2561, %v2555, %v2192
        %v2589 = vsel %vm2561, %v2556, %v2194
        %v2590 = vsel %vm2561, %v2557, %v2196
        %v2591 = vsel %vm2561, %v2558, %v2198
        %v2592 = vsel %vm2561, %v2559, %v2200
        %v2593 = vsel %vm2561, %v2560, %v2202
        %vm2594 = vcmask 187392
        %v2595 = vsel %vm2594, %v2562, %v2268
        %v2596 = vsel %vm2594, %v2563, %v2270
        %v2597 = vsel %vm2594, %v2564, %v2272
        %v2598 = vsel %vm2594, %v2565, %v2274
        %v2599 = vsel %vm2594, %v2566, %v2276
        %v2600 = vsel %vm2594, %v2567, %v2278
        %v2601 = vsel %vm2594, %v2568, %v2280
        %v2602 = vsel %vm2594, %v2569, %v2282
        %v2603 = vsel %vm2594, %v2570, %v2284
        %v2604 = vsel %vm2594, %v2571, %v2286
        %v2605 = vsel %vm2594, %v2572, %v2288
        %v2606 = vsel %vm2594, %v2573, %v2290
        %v2607 = vsel %vm2594, %v2574, %v2292
        %v2608 = vsel %vm2594, %v2575, %v2294
        %v2609 = vsel %vm2594, %v2576, %v2296
        %v2610 = vsel %vm2594, %v2577, %v2298
        %v2611 = vsel %vm2594, %v2578, %v2300
        %v2612 = vsel %vm2594, %v2579, %v2302
        %v2613 = vsel %vm2594, %v2580, %v2304
        %v2614 = vsel %vm2594, %v2581, %v2306
        %v2615 = vsel %vm2594, %v2582, %v2308
        %v2616 = vsel %vm2594, %v2583, %v2310
        %v2617 = vsel %vm2594, %v2584, %v2312
        %v2618 = vsel %vm2594, %v2585, %v2314
        %v2619 = vsel %vm2594, %v2586, %v2316
        %v2620 = vsel %vm2594, %v2587, %v2318
        %v2621 = vsel %vm2594, %v2588, %v2320
        %v2622 = vsel %vm2594, %v2589, %v2322
        %v2623 = vsel %vm2594, %v2590, %v2324
        %v2624 = vsel %vm2594, %v2591, %v2326
        %v2625 = vsel %vm2594, %v2592, %v2328
        %v2626 = vsel %vm2594, %v2593, %v2330
        %v2627 = vld [vmem:[%s2] sm:$0xff]
        %v2628 = vld [vmem:[%s2 + $0x8] sm:$0xff]
        %v2629 = vld [vmem:[%s2 + $0x10] sm:$0xff]
        %v2630 = vld [vmem:[%s3] sm:$0x1]
        %v2632 = vlaneseq
        %v2633 = vshrl.u32 %v2632, 7
        %v2634 = vsub.s32 0, %v2633
        %v2635 = vrot.slane %v2630, %v2634
        %vm2637 = vcmask 195584
        %v2639 = vsel %vm2637, %v2595, 0
        %v2642 = vsel %vm2637, %v2596, 0
        %v2645 = vsel %vm2637, %v2597, 0
        %v2648 = vsel %vm2637, %v2598, 0
        %v2651 = vsel %vm2637, %v2599, 0
        %v2654 = vsel %vm2637, %v2600, 0
        %v2657 = vsel %vm2637, %v2601, 0
        %v2660 = vsel %vm2637, %v2602, 0
        %v2663 = vsel %vm2637, %v2603, 0
        %v2666 = vsel %vm2637, %v2604, 0
        %v2669 = vsel %vm2637, %v2605, 0
        %v2672 = vsel %vm2637, %v2606, 0
        %v2675 = vsel %vm2637, %v2607, 0
        %v2678 = vsel %vm2637, %v2608, 0
        %v2681 = vsel %vm2637, %v2609, 0
        %v2684 = vsel %vm2637, %v2610, 0
        %v2687 = vsel %vm2637, %v2611, 0
        %v2690 = vsel %vm2637, %v2612, 0
        %v2693 = vsel %vm2637, %v2613, 0
        %v2696 = vsel %vm2637, %v2614, 0
        %v2699 = vsel %vm2637, %v2615, 0
        %v2702 = vsel %vm2637, %v2616, 0
        %v2705 = vsel %vm2637, %v2617, 0
        %v2708 = vsel %vm2637, %v2618, 0
        %v2711 = vsel %vm2637, %v2619, 0
        %v2714 = vsel %vm2637, %v2620, 0
        %v2717 = vsel %vm2637, %v2621, 0
        %v2720 = vsel %vm2637, %v2622, 0
        %v2723 = vsel %vm2637, %v2623, 0
        %v2726 = vsel %vm2637, %v2624, 0
        %v2729 = vsel %vm2637, %v2625, 0
        %v2732 = vsel %vm2637, %v2626, 0
        %2734 = vmatprep.subr.mxu0 0.0
        %2735 = vmatpush1.msra.mxu0 %v2627
        %2736 = vmatprep.subr.mxu0 0.0
        %2737 = vmatpush1.msra.mxu0 %v2628
        %2738 = vmatprep.subr.mxu0 0.0
        %2739 = vmatpush1.msra.mxu0 %v2629
        %2740 = vmatprep.subr.mxu0 0.0
        %2741 = vmatpush1.msra.mxu0 0.0
        %2742 = vmatprep.subr.mxu0 0.0
        %2743 = vmatpush1.msra.mxu0 0.0
        %2744 = vmatprep.subr.mxu0 0.0
        %2745 = vmatpush1.msra.mxu0 0.0
        %2746 = vmatprep.subr.mxu0 0.0
        %2747 = vmatpush1.msra.mxu0 0.0
        %2748 = vmatprep.subr.mxu0 0.0
        %2749 = vmatpush1.msra.mxu0 0.0
        %2750 = vmatprep.subr.mxu0 0.0
        %2751 = vmatpush1.msra.mxu0 0.0
        %2752 = vmatprep.subr.mxu0 0.0
        %2753 = vmatpush1.msra.mxu0 0.0
        %2754 = vmatprep.subr.mxu0 0.0
        %2755 = vmatpush1.msra.mxu0 0.0
        %2756 = vmatprep.subr.mxu0 0.0
        %2757 = vmatpush1.msra.mxu0 0.0
        %2758 = vmatprep.subr.mxu0 0.0
        %2759 = vmatpush1.msra.mxu0 0.0
        %2760 = vmatprep.subr.mxu0 0.0
        %2761 = vmatpush1.msra.mxu0 0.0
        %2762 = vmatprep.subr.mxu0 0.0
        %2763 = vmatpush1.msra.mxu0 0.0
        %2764 = vmatprep.subr.mxu0 0.0
        %2765 = vmatpush1.msra.mxu0 0.0
        %2766 = vmatprep.subr.mxu0 0.0
        %2767 = vmatpush1.msra.mxu0 0.0
        %2768 = vmatprep.subr.mxu0 0.0
        %2769 = vmatpush1.msra.mxu0 0.0
        %2770 = vmatprep.subr.mxu0 0.0
        %2771 = vmatpush1.msra.mxu0 0.0
        %2772 = vmatprep.subr.mxu0 0.0
        %2773 = vmatpush1.msra.mxu0 0.0
        %2774 = vmatprep.subr.mxu0 0.0
        %2775 = vmatpush1.msra.mxu0 0.0
        %2776 = vmatprep.subr.mxu0 0.0
        %2777 = vmatpush1.msra.mxu0 0.0
        %2778 = vmatprep.subr.mxu0 0.0
        %2779 = vmatpush1.msra.mxu0 0.0
        %2780 = vmatprep.subr.mxu0 0.0
        %2781 = vmatpush1.msra.mxu0 0.0
        %2782 = vmatprep.subr.mxu0 0.0
        %2783 = vmatpush1.msra.mxu0 0.0
        %2784 = vmatprep.subr.mxu0 0.0
        %2785 = vmatpush1.msra.mxu0 0.0
        %2786 = vmatprep.subr.mxu0 0.0
        %2787 = vmatpush1.msra.mxu0 0.0
        %2788 = vmatprep.subr.mxu0 0.0
        %2789 = vmatpush1.msra.mxu0 0.0
        %2790 = vmatprep.subr.mxu0 0.0
        %2791 = vmatpush1.msra.mxu0 0.0
        %2792 = vmatprep.subr.mxu0 0.0
        %2793 = vmatpush1.msra.mxu0 0.0
        %2794 = vmatprep.subr.mxu0 0.0
        %2795 = vmatpush1.msra.mxu0 0.0
        %2796 = vmatprep.subr.mxu0 0.0
        %2797 = vmatpush1.msra.mxu0 0.0
        %2798 = vmatprep.mubr.f32.mxu0 0.0
        %2799 = vmatmul.mubr.f32.gmra.mrb[0].mxu0 %v2639
        %v2800 = vpop.f32.mrb[0].mxu0
        %v2801 = vadd.f32 %v2635, %v2800
        %v2802 = vpop.f32.mrb[0].mxu0
        %2803 = vmatprep.mubr.f32.mxu0 0.0
        %2804 = vmatmul.mubr.f32.gmra.mrb[0].mxu0 %v2642
        %v2805 = vpop.f32.mrb[0].mxu0
        %v2806 = vadd.f32 %v2635, %v2805
        %v2807 = vpop.f32.mrb[0].mxu0
        %2808 = vmatprep.mubr.f32.mxu0 0.0
        %2809 = vmatmul.mubr.f32.gmra.mrb[0].mxu0 %v2645
        %v2810 = vpop.f32.mrb[0].mxu0
        %v2811 = vadd.f32 %v2635, %v2810
        %v2812 = vpop.f32.mrb[0].mxu0
        %2813 = vmatprep.mubr.f32.mxu0 0.0
        %2814 = vmatmul.mubr.f32.gmra.mrb[0].mxu0 %v2648
        %v2815 = vpop.f32.mrb[0].mxu0
        %v2816 = vadd.f32 %v2635, %v2815
        %v2817 = vpop.f32.mrb[0].mxu0
        %2818 = vmatprep.mubr.f32.mxu0 0.0
        %2819 = vmatmul.mubr.f32.gmra.mrb[0].mxu0 %v2651
        %v2820 = vpop.f32.mrb[0].mxu0
        %v2821 = vadd.f32 %v2635, %v2820
        %v2822 = vpop.f32.mrb[0].mxu0
        %2823 = vmatprep.mubr.f32.mxu0 0.0
        %2824 = vmatmul.mubr.f32.gmra.mrb[0].mxu0 %v2654
        %v2825 = vpop.f32.mrb[0].mxu0
        %v2826 = vadd.f32 %v2635, %v2825
        %v2827 = vpop.f32.mrb[0].mxu0
        %2828 = vmatprep.mubr.f32.mxu0 0.0
        %2829 = vmatmul.mubr.f32.gmra.mrb[0].mxu0 %v2657
        %v2830 = vpop.f32.mrb[0].mxu0
        %v2831 = vadd.f32 %v2635, %v2830
        %v2832 = vpop.f32.mrb[0].mxu0
        %2833 = vmatprep.mubr.f32.mxu0 0.0
        %2834 = vmatmul.mubr.f32.gmra.mrb[0].mxu0 %v2660
        %v2835 = vpop.f32.mrb[0].mxu0
        %v2836 = vadd.f32 %v2635, %v2835
        %v2837 = vpop.f32.mrb[0].mxu0
        %2838 = vmatprep.mubr.f32.mxu0 0.0
        %2839 = vmatmul.mubr.f32.gmra.mrb[0].mxu0 %v2663
        %v2840 = vpop.f32.mrb[0].mxu0
        %v2841 = vadd.f32 %v2635, %v2840
        %v2842 = vpop.f32.mrb[0].mxu0
        %2843 = vmatprep.mubr.f32.mxu0 0.0
        %2844 = vmatmul.mubr.f32.gmra.mrb[0].mxu0 %v2666
        %v2845 = vpop.f32.mrb[0].mxu0
        %v2846 = vadd.f32 %v2635, %v2845
        %v2847 = vpop.f32.mrb[0].mxu0
        %2848 = vmatprep.mubr.f32.mxu0 0.0
        %2849 = vmatmul.mubr.f32.gmra.mrb[0].mxu0 %v2669
        %v2850 = vpop.f32.mrb[0].mxu0
        %v2851 = vadd.f32 %v2635, %v2850
        %v2852 = vpop.f32.mrb[0].mxu0
        %2853 = vmatprep.mubr.f32.mxu0 0.0
        %2854 = vmatmul.mubr.f32.gmra.mrb[0].mxu0 %v2672
        %v2855 = vpop.f32.mrb[0].mxu0
        %v2856 = vadd.f32 %v2635, %v2855
        %v2857 = vpop.f32.mrb[0].mxu0
        %2858 = vmatprep.mubr.f32.mxu0 0.0
        %2859 = vmatmul.mubr.f32.gmra.mrb[0].mxu0 %v2675
        %v2860 = vpop.f32.mrb[0].mxu0
        %v2861 = vadd.f32 %v2635, %v2860
        %v2862 = vpop.f32.mrb[0].mxu0
        %2863 = vmatprep.mubr.f32.mxu0 0.0
        %2864 = vmatmul.mubr.f32.gmra.mrb[0].mxu0 %v2678
        %v2865 = vpop.f32.mrb[0].mxu0
        %v2866 = vadd.f32 %v2635, %v2865
        %v2867 = vpop.f32.mrb[0].mxu0
        %2868 = vmatprep.mubr.f32.mxu0 0.0
        %2869 = vmatmul.mubr.f32.gmra.mrb[0].mxu0 %v2681
        %v2870 = vpop.f32.mrb[0].mxu0
        %v2871 = vadd.f32 %v2635, %v2870
        %v2872 = vpop.f32.mrb[0].mxu0
        %2873 = vmatprep.mubr.f32.mxu0 0.0
        %2874 = vmatmul.mubr.f32.gmra.mrb[0].mxu0 %v2684
        %v2875 = vpop.f32.mrb[0].mxu0
        %v2876 = vadd.f32 %v2635, %v2875
        %v2877 = vpop.f32.mrb[0].mxu0
        %2878 = vmatprep.mubr.f32.mxu0 0.0
        %2879 = vmatmul.mubr.f32.gmra.mrb[0].mxu0 %v2687
        %v2880 = vpop.f32.mrb[0].mxu0
        %v2881 = vadd.f32 %v2635, %v2880
        %v2882 = vpop.f32.mrb[0].mxu0
        %2883 = vmatprep.mubr.f32.mxu0 0.0
        %2884 = vmatmul.mubr.f32.gmra.mrb[0].mxu0 %v2690
        %v2885 = vpop.f32.mrb[0].mxu0
        %v2886 = vadd.f32 %v2635, %v2885
        %v2887 = vpop.f32.mrb[0].mxu0
        %2888 = vmatprep.mubr.f32.mxu0 0.0
        %2889 = vmatmul.mubr.f32.gmra.mrb[0].mxu0 %v2693
        %v2890 = vpop.f32.mrb[0].mxu0
        %v2891 = vadd.f32 %v2635, %v2890
        %v2892 = vpop.f32.mrb[0].mxu0
        %2893 = vmatprep.mubr.f32.mxu0 0.0
        %2894 = vmatmul.mubr.f32.gmra.mrb[0].mxu0 %v2696
        %v2895 = vpop.f32.mrb[0].mxu0
        %v2896 = vadd.f32 %v2635, %v2895
        %v2897 = vpop.f32.mrb[0].mxu0
        %2898 = vmatprep.mubr.f32.mxu0 0.0
        %2899 = vmatmul.mubr.f32.gmra.mrb[0].mxu0 %v2699
        %v2900 = vpop.f32.mrb[0].mxu0
        %v2901 = vadd.f32 %v2635, %v2900
        %v2902 = vpop.f32.mrb[0].mxu0
        %2903 = vmatprep.mubr.f32.mxu0 0.0
        %2904 = vmatmul.mubr.f32.gmra.mrb[0].mxu0 %v2702
        %v2905 = vpop.f32.mrb[0].mxu0
        %v2906 = vadd.f32 %v2635, %v2905
        %v2907 = vpop.f32.mrb[0].mxu0
        %2908 = vmatprep.mubr.f32.mxu0 0.0
        %2909 = vmatmul.mubr.f32.gmra.mrb[0].mxu0 %v2705
        %v2910 = vpop.f32.mrb[0].mxu0
        %v2911 = vadd.f32 %v2635, %v2910
        %v2912 = vpop.f32.mrb[0].mxu0
        %2913 = vmatprep.mubr.f32.mxu0 0.0
        %2914 = vmatmul.mubr.f32.gmra.mrb[0].mxu0 %v2708
        %v2915 = vpop.f32.mrb[0].mxu0
        %v2916 = vadd.f32 %v2635, %v2915
        %v2917 = vpop.f32.mrb[0].mxu0
        %2918 = vmatprep.mubr.f32.mxu0 0.0
        %2919 = vmatmul.mubr.f32.gmra.mrb[0].mxu0 %v2711
        %v2920 = vpop.f32.mrb[0].mxu0
        %v2921 = vadd.f32 %v2635, %v2920
        %v2922 = vpop.f32.mrb[0].mxu0
        %2923 = vmatprep.mubr.f32.mxu0 0.0
        %2924 = vmatmul.mubr.f32.gmra.mrb[0].mxu0 %v2714
        %v2925 = vpop.f32.mrb[0].mxu0
        %v2926 = vadd.f32 %v2635, %v2925
        %v2927 = vpop.f32.mrb[0].mxu0
        %2928 = vmatprep.mubr.f32.mxu0 0.0
        %2929 = vmatmul.mubr.f32.gmra.mrb[0].mxu0 %v2717
        %v2930 = vpop.f32.mrb[0].mxu0
        %v2931 = vadd.f32 %v2635, %v2930
        %v2932 = vpop.f32.mrb[0].mxu0
        %2933 = vmatprep.mubr.f32.mxu0 0.0
        %2934 = vmatmul.mubr.f32.gmra.mrb[0].mxu0 %v2720
        %v2935 = vpop.f32.mrb[0].mxu0
        %v2936 = vadd.f32 %v2635, %v2935
        %v2937 = vpop.f32.mrb[0].mxu0
        %2938 = vmatprep.mubr.f32.mxu0 0.0
        %2939 = vmatmul.mubr.f32.gmra.mrb[0].mxu0 %v2723
        %v2940 = vpop.f32.mrb[0].mxu0
        %v2941 = vadd.f32 %v2635, %v2940
        %v2942 = vpop.f32.mrb[0].mxu0
        %2943 = vmatprep.mubr.f32.mxu0 0.0
        %2944 = vmatmul.mubr.f32.gmra.mrb[0].mxu0 %v2726
        %v2945 = vpop.f32.mrb[0].mxu0
        %v2946 = vadd.f32 %v2635, %v2945
        %v2947 = vpop.f32.mrb[0].mxu0
        %2948 = vmatprep.mubr.f32.mxu0 0.0
        %2949 = vmatmul.mubr.f32.gmra.mrb[0].mxu0 %v2729
        %v2950 = vpop.f32.mrb[0].mxu0
        %v2951 = vadd.f32 %v2635, %v2950
        %v2952 = vpop.f32.mrb[0].mxu0
        %2953 = vmatprep.mubr.f32.mxu0 0.0
        %2954 = vmatmul.mubr.f32.gmra.mrb[0].mxu0 %v2732
        %v2955 = vpop.f32.mrb[0].mxu0
        %v2956 = vadd.f32 %v2635, %v2955
        %v2957 = vpop.f32.mrb[0].mxu0
        %2958 = vdwg.mxu0
        %v2959 = vxor.u32 %v2801, 2147483648
        %v2960 = vxor.u32 %v2806, 2147483648
        %v2961 = vxor.u32 %v2811, 2147483648
        %v2962 = vxor.u32 %v2816, 2147483648
        %v2963 = vxor.u32 %v2821, 2147483648
        %v2964 = vxor.u32 %v2826, 2147483648
        %v2965 = vxor.u32 %v2831, 2147483648
        %v2966 = vxor.u32 %v2836, 2147483648
        %v2967 = vxor.u32 %v2841, 2147483648
        %v2968 = vxor.u32 %v2846, 2147483648
        %v2969 = vxor.u32 %v2851, 2147483648
        %v2970 = vxor.u32 %v2856, 2147483648
        %v2971 = vxor.u32 %v2861, 2147483648
        %v2972 = vxor.u32 %v2866, 2147483648
        %v2973 = vxor.u32 %v2871, 2147483648
        %v2974 = vxor.u32 %v2876, 2147483648
        %v2975 = vxor.u32 %v2881, 2147483648
        %v2976 = vxor.u32 %v2886, 2147483648
        %v2977 = vxor.u32 %v2891, 2147483648
        %v2978 = vxor.u32 %v2896, 2147483648
        %v2979 = vxor.u32 %v2901, 2147483648
        %v2980 = vxor.u32 %v2906, 2147483648
        %v2981 = vxor.u32 %v2911, 2147483648
        %v2982 = vxor.u32 %v2916, 2147483648
        %v2983 = vxor.u32 %v2921, 2147483648
        %v2984 = vxor.u32 %v2926, 2147483648
        %v2985 = vxor.u32 %v2931, 2147483648
        %v2986 = vxor.u32 %v2936, 2147483648
        %v2987 = vxor.u32 %v2941, 2147483648
        %v2988 = vxor.u32 %v2946, 2147483648
        %v2989 = vxor.u32 %v2951, 2147483648
        %v2990 = vxor.u32 %v2956, 2147483648
        %v2991 = vmul.f32 %v2959, 1.442695
        %v2992 = vpow.pop %v2991
        %v2993 = vmul.f32 %v2960, 1.442695
        %v2994 = vpow.pop %v2993
        %v2995 = vmul.f32 %v2961, 1.442695
        %v2996 = vpow.pop %v2995
        %v2997 = vmul.f32 %v2962, 1.442695
        %v2998 = vpow.pop %v2997
        %v2999 = vmul.f32 %v2963, 1.442695
        %v3000 = vpow.pop %v2999
        %v3001 = vmul.f32 %v2964, 1.442695
        %v3002 = vpow.pop %v3001
        %v3003 = vmul.f32 %v2965, 1.442695
        %v3004 = vpow.pop %v3003
        %v3005 = vmul.f32 %v2966, 1.442695
        %v3006 = vpow.pop %v3005
        %v3007 = vmul.f32 %v2967, 1.442695
        %v3008 = vpow.pop %v3007
        %v3009 = vmul.f32 %v2968, 1.442695
        %v3010 = vpow.pop %v3009
        %v3011 = vmul.f32 %v2969, 1.442695
        %v3012 = vpow.pop %v3011
        %v3013 = vmul.f32 %v2970, 1.442695
        %v3014 = vpow.pop %v3013
        %v3015 = vmul.f32 %v2971, 1.442695
        %v3016 = vpow.pop %v3015
        %v3017 = vmul.f32 %v2972, 1.442695
        %v3018 = vpow.pop %v3017
        %v3019 = vmul.f32 %v2973, 1.442695
        %v3020 = vpow.pop %v3019
        %v3021 = vmul.f32 %v2974, 1.442695
        %v3022 = vpow.pop %v3021
        %v3023 = vmul.f32 %v2975, 1.442695
        %v3024 = vpow.pop %v3023
        %v3025 = vmul.f32 %v2976, 1.442695
        %v3026 = vpow.pop %v3025
        %v3027 = vmul.f32 %v2977, 1.442695
        %v3028 = vpow.pop %v3027
        %v3029 = vmul.f32 %v2978, 1.442695
        %v3030 = vpow.pop %v3029
        %v3031 = vmul.f32 %v2979, 1.442695
        %v3032 = vpow.pop %v3031
        %v3033 = vmul.f32 %v2980, 1.442695
        %v3034 = vpow.pop %v3033
        %v3035 = vmul.f32 %v2981, 1.442695
        %v3036 = vpow.pop %v3035
        %v3037 = vmul.f32 %v2982, 1.442695
        %v3038 = vpow.pop %v3037
        %v3039 = vmul.f32 %v2983, 1.442695
        %v3040 = vpow.pop %v3039
        %v3041 = vmul.f32 %v2984, 1.442695
        %v3042 = vpow.pop %v3041
        %v3043 = vmul.f32 %v2985, 1.442695
        %v3044 = vpow.pop %v3043
        %v3045 = vmul.f32 %v2986, 1.442695
        %v3046 = vpow.pop %v3045
        %v3047 = vmul.f32 %v2987, 1.442695
        %v3048 = vpow.pop %v3047
        %v3049 = vmul.f32 %v2988, 1.442695
        %v3050 = vpow.pop %v3049
        %v3051 = vmul.f32 %v2989, 1.442695
        %v3052 = vpow.pop %v3051
        %v3053 = vmul.f32 %v2990, 1.442695
        %v3054 = vpow.pop %v3053
        %v3055 = vadd.f32 %v2992, 1.0
        %v3056 = vadd.f32 %v2994, 1.0
        %v3057 = vadd.f32 %v2996, 1.0
        %v3058 = vadd.f32 %v2998, 1.0
        %v3059 = vadd.f32 %v3000, 1.0
        %v3060 = vadd.f32 %v3002, 1.0
        %v3061 = vadd.f32 %v3004, 1.0
        %v3062 = vadd.f32 %v3006, 1.0
        %v3063 = vadd.f32 %v3008, 1.0
        %v3064 = vadd.f32 %v3010, 1.0
        %v3065 = vadd.f32 %v3012, 1.0
        %v3066 = vadd.f32 %v3014, 1.0
        %v3067 = vadd.f32 %v3016, 1.0
        %v3068 = vadd.f32 %v3018, 1.0
        %v3069 = vadd.f32 %v3020, 1.0
        %v3070 = vadd.f32 %v3022, 1.0
        %v3071 = vadd.f32 %v3024, 1.0
        %v3072 = vadd.f32 %v3026, 1.0
        %v3073 = vadd.f32 %v3028, 1.0
        %v3074 = vadd.f32 %v3030, 1.0
        %v3075 = vadd.f32 %v3032, 1.0
        %v3076 = vadd.f32 %v3034, 1.0
        %v3077 = vadd.f32 %v3036, 1.0
        %v3078 = vadd.f32 %v3038, 1.0
        %v3079 = vadd.f32 %v3040, 1.0
        %v3080 = vadd.f32 %v3042, 1.0
        %v3081 = vadd.f32 %v3044, 1.0
        %v3082 = vadd.f32 %v3046, 1.0
        %v3083 = vadd.f32 %v3048, 1.0
        %v3084 = vadd.f32 %v3050, 1.0
        %v3085 = vadd.f32 %v3052, 1.0
        %v3086 = vadd.f32 %v3054, 1.0
        %v3087 = vrcp.pop %v3055
        %v3088 = vmul.f32 1.0, %v3087
        %v3089 = vrcp.pop %v3056
        %v3090 = vmul.f32 1.0, %v3089
        %v3091 = vrcp.pop %v3057
        %v3092 = vmul.f32 1.0, %v3091
        %v3093 = vrcp.pop %v3058
        %v3094 = vmul.f32 1.0, %v3093
        %v3095 = vrcp.pop %v3059
        %v3096 = vmul.f32 1.0, %v3095
        %v3097 = vrcp.pop %v3060
        %v3098 = vmul.f32 1.0, %v3097
        %v3099 = vrcp.pop %v3061
        %v3100 = vmul.f32 1.0, %v3099
        %v3101 = vrcp.pop %v3062
        %v3102 = vmul.f32 1.0, %v3101
        %v3103 = vrcp.pop %v3063
        %v3104 = vmul.f32 1.0, %v3103
        %v3105 = vrcp.pop %v3064
        %v3106 = vmul.f32 1.0, %v3105
        %v3107 = vrcp.pop %v3065
        %v3108 = vmul.f32 1.0, %v3107
        %v3109 = vrcp.pop %v3066
        %v3110 = vmul.f32 1.0, %v3109
        %v3111 = vrcp.pop %v3067
        %v3112 = vmul.f32 1.0, %v3111
        %v3113 = vrcp.pop %v3068
        %v3114 = vmul.f32 1.0, %v3113
        %v3115 = vrcp.pop %v3069
        %v3116 = vmul.f32 1.0, %v3115
        %v3117 = vrcp.pop %v3070
        %v3118 = vmul.f32 1.0, %v3117
        %v3119 = vrcp.pop %v3071
        %v3120 = vmul.f32 1.0, %v3119
        %v3121 = vrcp.pop %v3072
        %v3122 = vmul.f32 1.0, %v3121
        %v3123 = vrcp.pop %v3073
        %v3124 = vmul.f32 1.0, %v3123
        %v3125 = vrcp.pop %v3074
        %v3126 = vmul.f32 1.0, %v3125
        %v3127 = vrcp.pop %v3075
        %v3128 = vmul.f32 1.0, %v3127
        %v3129 = vrcp.pop %v3076
        %v3130 = vmul.f32 1.0, %v3129
        %v3131 = vrcp.pop %v3077
        %v3132 = vmul.f32 1.0, %v3131
        %v3133 = vrcp.pop %v3078
        %v3134 = vmul.f32 1.0, %v3133
        %v3135 = vrcp.pop %v3079
        %v3136 = vmul.f32 1.0, %v3135
        %v3137 = vrcp.pop %v3080
        %v3138 = vmul.f32 1.0, %v3137
        %v3139 = vrcp.pop %v3081
        %v3140 = vmul.f32 1.0, %v3139
        %v3141 = vrcp.pop %v3082
        %v3142 = vmul.f32 1.0, %v3141
        %v3143 = vrcp.pop %v3083
        %v3144 = vmul.f32 1.0, %v3143
        %v3145 = vrcp.pop %v3084
        %v3146 = vmul.f32 1.0, %v3145
        %v3147 = vrcp.pop %v3085
        %v3148 = vmul.f32 1.0, %v3147
        %v3149 = vrcp.pop %v3086
        %v3150 = vmul.f32 1.0, %v3149
        %v3151 = vmul.f32 %v2801, %v3088
        %v3152 = vmul.f32 %v2806, %v3090
        %v3153 = vmul.f32 %v2811, %v3092
        %v3154 = vmul.f32 %v2816, %v3094
        %v3155 = vmul.f32 %v2821, %v3096
        %v3156 = vmul.f32 %v2826, %v3098
        %v3157 = vmul.f32 %v2831, %v3100
        %v3158 = vmul.f32 %v2836, %v3102
        %v3159 = vmul.f32 %v2841, %v3104
        %v3160 = vmul.f32 %v2846, %v3106
        %v3161 = vmul.f32 %v2851, %v3108
        %v3162 = vmul.f32 %v2856, %v3110
        %v3163 = vmul.f32 %v2861, %v3112
        %v3164 = vmul.f32 %v2866, %v3114
        %v3165 = vmul.f32 %v2871, %v3116
        %v3166 = vmul.f32 %v2876, %v3118
        %v3167 = vmul.f32 %v2881, %v3120
        %v3168 = vmul.f32 %v2886, %v3122
        %v3169 = vmul.f32 %v2891, %v3124
        %v3170 = vmul.f32 %v2896, %v3126
        %v3171 = vmul.f32 %v2901, %v3128
        %v3172 = vmul.f32 %v2906, %v3130
        %v3173 = vmul.f32 %v2911, %v3132
        %v3174 = vmul.f32 %v2916, %v3134
        %v3175 = vmul.f32 %v2921, %v3136
        %v3176 = vmul.f32 %v2926, %v3138
        %v3177 = vmul.f32 %v2931, %v3140
        %v3178 = vmul.f32 %v2936, %v3142
        %v3179 = vmul.f32 %v2941, %v3144
        %v3180 = vmul.f32 %v2946, %v3146
        %v3181 = vmul.f32 %v2951, %v3148
        %v3182 = vmul.f32 %v2956, %v3150
        %v3183 = vld [vmem:[%s4] sm:$0xff]
        %v3184 = vld [vmem:[%s5] sm:$0xff]
        %3186 = vset.pattern.permute.xlu0 0
        %3187 = vperm.xlu0 %3186, %v3184
        %v3188 = vpop.permute.xlu0 %3187
        %3190 = vmatprep.subr.mxu0 0.0
        %3191 = vmatpush1.xpose.msra.mxu0 %v3151
        %3192 = vmatprep.subr.mxu0 0.0
        %3193 = vmatpush1.xpose.msra.mxu0 %v3152
        %3194 = vmatprep.subr.mxu0 0.0
        %3195 = vmatpush1.xpose.msra.mxu0 %v3153
        %3196 = vmatprep.subr.mxu0 0.0
        %3197 = vmatpush1.xpose.msra.mxu0 %v3154
        %3198 = vmatprep.subr.mxu0 0.0
        %3199 = vmatpush1.xpose.msra.mxu0 %v3155
        %3200 = vmatprep.subr.mxu0 0.0
        %3201 = vmatpush1.xpose.msra.mxu0 %v3156
        %3202 = vmatprep.subr.mxu0 0.0
        %3203 = vmatpush1.xpose.msra.mxu0 %v3157
        %3204 = vmatprep.subr.mxu0 0.0
        %3205 = vmatpush1.xpose.msra.mxu0 %v3158
        %3206 = vmatprep.subr.mxu0 0.0
        %3207 = vmatpush1.xpose.msra.mxu0 %v3159
        %3208 = vmatprep.subr.mxu0 0.0
        %3209 = vmatpush1.xpose.msra.mxu0 %v3160
        %3210 = vmatprep.subr.mxu0 0.0
        %3211 = vmatpush1.xpose.msra.mxu0 %v3161
        %3212 = vmatprep.subr.mxu0 0.0
        %3213 = vmatpush1.xpose.msra.mxu0 %v3162
        %3214 = vmatprep.subr.mxu0 0.0
        %3215 = vmatpush1.xpose.msra.mxu0 %v3163
        %3216 = vmatprep.subr.mxu0 0.0
        %3217 = vmatpush1.xpose.msra.mxu0 %v3164
        %3218 = vmatprep.subr.mxu0 0.0
        %3219 = vmatpush1.xpose.msra.mxu0 %v3165
        %3220 = vmatprep.subr.mxu0 0.0
        %3221 = vmatpush1.xpose.msra.mxu0 %v3166
        %3222 = vmatprep.subr.mxu0 0.0
        %3223 = vmatpush1.xpose.msra.mxu0 %v3167
        %3224 = vmatprep.subr.mxu0 0.0
        %3225 = vmatpush1.xpose.msra.mxu0 %v3168
        %3226 = vmatprep.subr.mxu0 0.0
        %3227 = vmatpush1.xpose.msra.mxu0 %v3169
        %3228 = vmatprep.subr.mxu0 0.0
        %3229 = vmatpush1.xpose.msra.mxu0 %v3170
        %3230 = vmatprep.subr.mxu0 0.0
        %3231 = vmatpush1.xpose.msra.mxu0 %v3171
        %3232 = vmatprep.subr.mxu0 0.0
        %3233 = vmatpush1.xpose.msra.mxu0 %v3172
        %3234 = vmatprep.subr.mxu0 0.0
        %3235 = vmatpush1.xpose.msra.mxu0 %v3173
        %3236 = vmatprep.subr.mxu0 0.0
        %3237 = vmatpush1.xpose.msra.mxu0 %v3174
        %3238 = vmatprep.subr.mxu0 0.0
        %3239 = vmatpush1.xpose.msra.mxu0 %v3175
        %3240 = vmatprep.subr.mxu0 0.0
        %3241 = vmatpush1.xpose.msra.mxu0 %v3176
        %3242 = vmatprep.subr.mxu0 0.0
        %3243 = vmatpush1.xpose.msra.mxu0 %v3177
        %3244 = vmatprep.subr.mxu0 0.0
        %3245 = vmatpush1.xpose.msra.mxu0 %v3178
        %3246 = vmatprep.subr.mxu0 0.0
        %3247 = vmatpush1.xpose.msra.mxu0 %v3179
        %3248 = vmatprep.subr.mxu0 0.0
        %3249 = vmatpush1.xpose.msra.mxu0 %v3180
        %3250 = vmatprep.subr.mxu0 0.0
        %3251 = vmatpush1.xpose.msra.mxu0 %v3181
        %3252 = vmatprep.subr.mxu0 0.0
        %3253 = vmatpush1.xpose.msra.mxu0 %v3182
        %3254 = vmatprep.mubr.f32.mxu0 0.0
        %3255 = vmatmul.mubr.f32.gmra.mrb[0].mxu0 %v3183
        %v3256 = vpop.f32.mrb[0].mxu0
        %v3257 = vadd.f32 %v3188, %v3256
        %v3258 = vpop.f32.mrb[0].mxu0
        %v3259 = vadd.f32 %v3188, %v3258
        %3260 = vdwg.mxu0
        %v3261 = vlaneseq
        %v3262 = vshrl.u32 %v3261, 7
        %vm3263 = vcmp.eq.s32.totalorder %v3262, 0
        %v3264 = vmul.f32 %v3257, 1.442695
        %v3265 = vpow.pop %v3264
        %v3266 = vmul.f32 %v3259, 1.442695
        %v3267 = vpow.pop %v3266
        %v3268 = vxor.u32 %v3257, 2147483648
        %v3269 = vxor.u32 %v3259, 2147483648
        %v3270 = vmul.f32 %v3268, 1.442695
        %v3271 = vpow.pop %v3270
        %v3272 = vmul.f32 %v3269, 1.442695
        %v3273 = vpow.pop %v3272
        %v3274 = vadd.f32 %v3271, 1.0
        %v3275 = vadd.f32 %v3273, 1.0
        %v3276 = vrcp.pop %v3274
        %v3277 = vmul.f32 1.0, %v3276
        %v3278 = vrcp.pop %v3275
        %v3279 = vmul.f32 1.0, %v3278
        %v3280 = vmul.f32 %v3277, 1.002
        %v3281 = vmul.f32 %v3279, 1.002
        %v3282 = vsub.f32 %v3280, 0.001
        %v3283 = vsub.f32 %v3281, 0.001
        %v3284 = vsel %vm3263, %v3265, %v3282
        %v3285 = vsel %vm3263, %v3267, %v3283
        %v3288 = vcombine.low %v3284, %v3285
        %3290 = vst [vmem:[%s285] sm:$0xff] %v3288
        %s3291 = sand.u32 %s164, 1
        %s3292 = scalar_lea.sflag [#allocation3], %s3291
        %s3293 = sand.u32 %s164, 1
        %s3294 = smul.addr %s3293, 8
        %s3295 = scalar_lea.vmem [#allocation2], %s3294
        // Predicated region
        $region45: #{tpu_custom_call.1} parent=43 // pred_check
          %p3296 = pneg %p174
        $region46: #{tpu_custom_call.1} parent=43 // pred_check_branch
          %3298 = sbr.rel (%p3296) target = $region48
        $region47: #{tpu_custom_call.1} parent=43 // pred_region
          %s3299 = smul.u32 2, %s20
          %s3301 = ssub.s32 128, 128
          %3302 = vsyncadd %s3292, %s3301
          %s3303 = smul.addr %s3299, 64
          %s3304 = scalar_lea.hbm %s6, %s3303
          %s3306 = sshll.u32 %s3295, 4
          %s3307 = int_to_ptr.vmem [resolvable:$true] %s3306
          %3309 = dma.vmem_to_hbm [thread:$0]  %s3307, 128, %s3304, %s3292
        $region48: #{tpu_custom_call.1} parent=43 // pred_fallthru
          _
      $region44: #{tpu_custom_call.1} parent=5 // pred_fallthru
        _
      %p3310 = scmp.le.s32.totalorder 2, %s15
      // Predicated region
      $region49: #{tpu_custom_call.1} parent=5 // pred_check
        %p3311 = pneg %p3310
      $region50: #{tpu_custom_call.1} parent=5 // pred_check_branch
        %3313 = sbr.rel (%p3311) target = $region52
      $region51: #{tpu_custom_call.1} parent=5 // pred_region
        %s3314 = ssub.s32 %s15, 2
        // Predicated region
        $region53: #{tpu_custom_call.1} parent=51 // pred_check
          %p3315 = pneg %p180
        $region54: #{tpu_custom_call.1} parent=51 // pred_check_branch
          %3317 = sbr.rel (%p3315) target = $region56
        $region55: #{tpu_custom_call.1} parent=51 // pred_region
          %s3318 = sand.u32 %s165, 1
          %s3319 = scalar_lea.sflag [#allocation3], %s3318
          %s3320 = sand.u32 %s165, 1
          %s3321 = smul.addr %s3320, 8
          %s3322 = scalar_lea.vmem [#allocation2], %s3321
          %3323 = dma.done %s3319, 128
        $region56: #{tpu_custom_call.1} parent=51 // pred_fallthru
          _
      $region52: #{tpu_custom_call.1} parent=5 // pred_fallthru
        _
    $region6: #{tpu_custom_call.1} parent=1 // loop_footer
      %s19 = sadd.s32 1, %s15
    $region7: #{tpu_custom_call.1} parent=1 // loop_footer_branch
      %14 = sbr.rel target = $region3
    $region8: #{tpu_custom_call.1} parent=1 // loop_exit
      _
    %3324 = vsyncpa [#allocation3], 1
    %s3325 = scalar_lea.sflag [#allocation3], 1
    %3326 = vsyncpa %s3325, 1

</llo_original>
